<compile_context>
chip_gen: v7x
topology: tpu7x:2x2x1
jax: 0.10.0
libtpu: 0.0.40
codegen_flags: <defaults>
</compile_context>

<pallas_src>
import math

import jax
import jax.numpy as jnp
from jax.experimental import pallas as pl
from jax.experimental.pallas import tpu as pltpu

NUM_REL = 5


def yoro_kernel(hidden_ref, dist_ref, rel_ref,
                w1_ref, b1_ref, w2_ref, b2_ref,
                wh_ref, bh_ref,
                out_ref):
    n = dist_ref.shape[1]                    # (padded) sequence length, static
    cdt = w1_ref.dtype                       # MXU compute dtype (bf16 or f32)

    dist = dist_ref[0]                       # (N, N)   f32
    rel = rel_ref[0]                         # (5N, N)  f32, relation-major stack

    # Adjacency computed ONCE (f32 VPU), reused by both RGC layers.
    # Per-relation multiply+cast avoids materialising a 5x f32 broadcast of
    # `dist` before the multiply (smaller VMEM store traffic).
    adj_v = jnp.concatenate(
        [(dist * rel[r * n:(r + 1) * n]).astype(cdt) for r in range(NUM_REL)],
        axis=0)                              # (5N, N) in compute dtype

    def rgc(x, w_ref, b_ref):
        # (a) one fused MXU call over the stacked adjacency: (5N,N) @ (N,Din).
        y = jnp.dot(adj_v, x, preferred_element_type=jnp.float32).astype(cdt)
        # (b) per-relation weight contraction with K = Din, accumulated in f32.
        d_out = w_ref.shape[2]
        acc = jnp.zeros((n, d_out), jnp.float32)
        for r in range(NUM_REL):             # static unroll over 5 relations
            acc = acc + jnp.dot(y[r * n:(r + 1) * n], w_ref[r],
                                preferred_element_type=jnp.float32)
        return acc + b_ref[...]              # (1, Dout) bias broadcast

    # RGC layer 1 + ReLU (dropout = identity in eval mode)
    x1 = jnp.maximum(rgc(hidden_ref[0], w1_ref, b1_ref), 0.0).astype(cdt)
    # RGC layer 2 + ReLU (dropout = identity in eval mode)
    x2 = jnp.maximum(rgc(x1, w2_ref, b2_ref), 0.0).astype(cdt)

    # Fused, lane-dense output heads: [dense | op_dense | zero pad] -> unmasked vst
    out_ref[0] = (jnp.dot(x2, wh_ref[...], preferred_element_type=jnp.float32)
                  + bh_ref[...])


def yoro_forward(hidden, distance_adj, relation_adj, params,
                 *, compute_dtype=jnp.bfloat16):
    """hidden: (B,N,D) f32; distance_adj: (B,N,N); relation_adj: (B,5,N,N)."""
    B, N, D = hidden.shape
    P = params["wd"].shape[1]
    HPAD = max(128, ((2 * P + 127) // 128) * 128)   # lane-dense head width
    cdt = compute_dtype

    # --- wrapper-side (one-time) layout & fusion work ------------------------
    # Pad the sequence axis to a sublane multiple (8) so in-kernel static slices
    # at r*N are aligned.  Zero-padded adjacency rows/cols make padded positions
    # inert; padded output rows are sliced away below.
    NP = ((N + 7) // 8) * 8
    pad = NP - N

    hidden_c = jnp.pad(hidden.astype(cdt), ((0, 0), (0, pad), (0, 0)))
    dist = jnp.pad(distance_adj.astype(jnp.float32),
                   ((0, 0), (0, pad), (0, pad)))
    rel = jnp.pad(relation_adj.astype(jnp.float32),
                  ((0, 0), (0, 0), (0, pad), (0, pad)))
    rel_v = rel.reshape(B, NUM_REL * NP, NP)        # relation-major vertical stack

    w1 = params["w1"].astype(cdt)
    w2 = params["w2"].astype(cdt)
    b1 = params["b1"].astype(jnp.float32)
    b2 = params["b2"].astype(jnp.float32)
    # Fuse the two P-wide heads into one lane-dense (D, 128) weight / bias.
    wh = jnp.zeros((D, HPAD), cdt)
    wh = wh.at[:, :P].set(params["wd"].astype(cdt))
    wh = wh.at[:, P:2 * P].set(params["wop"].astype(cdt))
    bh = jnp.zeros((1, HPAD), jnp.float32)
    bh = bh.at[:, :P].set(params["bd"].astype(jnp.float32))
    bh = bh.at[:, P:2 * P].set(params["bop"].astype(jnp.float32))

    per_batch = lambda shape: pl.BlockSpec((1,) + shape,
                                           lambda b: (b,) + (0,) * len(shape))
    full = lambda shape: pl.BlockSpec(shape, lambda b: (0,) * len(shape))

    # VMEM budget derived from actual tile sizes (double-buffered per-batch
    # blocks + resident weights + live intermediates) with 1.5x headroom,
    # capped well below v7x's 64 MiB physical VMEM.
    nb = lambda shape, dt: math.prod(shape) * jnp.dtype(dt).itemsize
    blk = 2 * (nb((NP, D), cdt) + nb((NP, NP), jnp.float32)
               + nb((NUM_REL * NP, NP), jnp.float32)
               + nb((NP, HPAD), jnp.float32))
    wgt = (2 * nb((NUM_REL, D, D), cdt) + 2 * nb((1, D), jnp.float32)
           + nb((D, HPAD), cdt) + nb((1, HPAD), jnp.float32))
    live = (nb((NUM_REL * NP, NP), cdt) + nb((NUM_REL * NP, D), cdt)
            + 4 * nb((NP, D), jnp.float32) + nb((NP, HPAD), jnp.float32))
    vmem_limit = min(int(1.5 * (blk + wgt + live)) + (4 << 20), 100 << 20)

    flops = B * (2 * (2 * NUM_REL * NP * NP * D)      # adj_v @ x, both layers
                 + 2 * (2 * NUM_REL * NP * D * D)     # per-relation W, both layers
                 + 2 * NP * D * HPAD)                 # fused heads
    bytes_accessed = sum(a.size * a.dtype.itemsize
                         for a in (hidden_c, dist, rel_v, w1, b1, w2, b2, wh, bh))
    bytes_accessed += B * NP * HPAD * 4               # f32 output slab

    fn = pl.pallas_call(
        yoro_kernel,
        out_shape=jax.ShapeDtypeStruct((B, NP, HPAD), jnp.float32),
        grid=(B,),
        in_specs=[
            per_batch((NP, D)),                # hidden (compute dtype)
            per_batch((NP, NP)),               # distance_adj (f32)
            per_batch((NUM_REL * NP, NP)),     # relation_adj, relation-major stack
            full((NUM_REL, D, D)),             # W1 (compute dtype), constant index
            full((1, D)),                      # b1
            full((NUM_REL, D, D)),             # W2 (compute dtype), constant index
            full((1, D)),                      # b2
            full((D, HPAD)),                   # fused head weight
            full((1, HPAD)),                   # fused head bias
        ],
        out_specs=per_batch((NP, HPAD)),
        compiler_params=pltpu.CompilerParams(
            dimension_semantics=("parallel",),
            vmem_limit_bytes=vmem_limit,
        ),
        cost_estimate=pl.CostEstimate(flops=flops, transcendentals=0,
                                      bytes_accessed=bytes_accessed),
    )
    heads = fn(hidden_c, dist, rel_v, w1, b1, w2, b2, wh, bh)   # (B, NP, HPAD)
    logits = heads[:, :N, :P]
    op_logits = heads[:, :N, P:2 * P]
    return logits, op_logits


def yoro_reference(hidden, distance_adj, relation_adj, params):
    """Pure-JAX f32 reference matching the PyTorch forward (eval mode)."""
    adj = distance_adj[:, None, :, :] * relation_adj          # (B,5,N,N)

    def rgc(x, w, b):
        ax = jnp.einsum("brnm,bmd->brnd", adj, x)
        return jnp.einsum("brnd,rde->bne", ax, w) + b[0]

    x = jax.nn.relu(rgc(hidden, params["w1"], params["b1"]))
    x = jax.nn.relu(rgc(x, params["w2"], params["b2"]))
    op_logits = x @ params["wop"] + params["bop"][0]
    logits = x @ params["wd"] + params["bd"][0]
    return logits, op_logits


if __name__ == "__main__":
    B, N, D, P = 2, 8, 32, 4   # batch, seq, bert_dim, polarities_dim

    key = jax.random.PRNGKey(0)
    keys = jax.random.split(key, 12)

    hidden = jax.random.normal(keys[0], (B, N, D), jnp.float32)   # BERT last_hidden_state stand-in
    distance_adj = jax.random.uniform(keys[1], (B, N, N), jnp.float32)
    relation_adj = (jax.random.uniform(keys[2], (B, NUM_REL, N, N)) > 0.5).astype(jnp.float32)

    s = 0.1
    params = {
        "w1":  s * jax.random.normal(keys[3], (NUM_REL, D, D), jnp.float32),
        "b1":  s * jax.random.normal(keys[4], (1, D), jnp.float32),
        "w2":  s * jax.random.normal(keys[5], (NUM_REL, D, D), jnp.float32),
        "b2":  s * jax.random.normal(keys[6], (1, D), jnp.float32),
        "wop": s * jax.random.normal(keys[7], (D, P), jnp.float32),
        "bop": s * jax.random.normal(keys[8], (1, P), jnp.float32),
        "wd":  s * jax.random.normal(keys[9], (D, P), jnp.float32),
        "bd":  s * jax.random.normal(keys[10], (1, P), jnp.float32),
    }

    ref_logits, ref_op_logits = yoro_reference(hidden, distance_adj, relation_adj, params)

    # 1) f32 compute path: tight correctness check against the PyTorch-equivalent math.
    logits, op_logits = yoro_forward(hidden, distance_adj, relation_adj, params,
                                     compute_dtype=jnp.float32)
    jax.block_until_ready((logits, op_logits))
    assert jnp.allclose(logits, ref_logits, atol=1e-4, rtol=1e-4)
    assert jnp.allclose(op_logits, ref_op_logits, atol=1e-4, rtol=1e-4)

    # 2) bf16 MXU path (default, perf config for v5e/v6e/v7x): loose relative-error check.
    logits_bf, op_logits_bf = yoro_forward(hidden, distance_adj, relation_adj, params)
    jax.block_until_ready((logits_bf, op_logits_bf))

    def rel_err(a, b):
        return float(jnp.linalg.norm(a.astype(jnp.float32) - b) / jnp.linalg.norm(b))

    assert rel_err(logits_bf, ref_logits) < 1e-1
    assert rel_err(op_logits_bf, ref_op_logits) < 1e-1

    print("KERNEL_OK")
</pallas_src>

<mosaic_0001>
module attributes {stable_mosaic.version = 11 : i64} {
  func.func @yoro_kernel(%arg0: i32, %arg1: memref<1x8x32xf32, #tpu.memory_space<vmem>>, %arg2: memref<1x8x8xf32, #tpu.memory_space<vmem>>, %arg3: memref<1x40x8xf32, #tpu.memory_space<vmem>>, %arg4: memref<5x32x32xf32, #tpu.memory_space<vmem>>, %arg5: memref<1x32xf32, #tpu.memory_space<vmem>>, %arg6: memref<5x32x32xf32, #tpu.memory_space<vmem>>, %arg7: memref<1x32xf32, #tpu.memory_space<vmem>>, %arg8: memref<32x128xf32, #tpu.memory_space<vmem>>, %arg9: memref<1x128xf32, #tpu.memory_space<vmem>>, %arg10: memref<1x8x128xf32, #tpu.memory_space<vmem>>) attributes {dimension_semantics = [#tpu.dimension_semantics<parallel>], iteration_bounds = array<i64: 2>, scalar_prefetch = 0 : i64, scratch_operands = 0 : i64, tpu.core_type = #tpu.core_type<tc>, window_params = [{transform_indices = @transform_0, window_bounds = array<i64: 1, 8, 32>}, {transform_indices = @transform_1, window_bounds = array<i64: 1, 8, 8>}, {transform_indices = @transform_2, window_bounds = array<i64: 1, 40, 8>}, {pipeline_mode = #tpu.pipeline_mode<synchronous>, transform_indices = @transform_3, window_bounds = array<i64: 5, 32, 32>}, {pipeline_mode = #tpu.pipeline_mode<synchronous>, transform_indices = @transform_4, window_bounds = array<i64: 1, 32>}, {pipeline_mode = #tpu.pipeline_mode<synchronous>, transform_indices = @transform_5, window_bounds = array<i64: 5, 32, 32>}, {pipeline_mode = #tpu.pipeline_mode<synchronous>, transform_indices = @transform_6, window_bounds = array<i64: 1, 32>}, {pipeline_mode = #tpu.pipeline_mode<synchronous>, transform_indices = @transform_7, window_bounds = array<i64: 32, 128>}, {pipeline_mode = #tpu.pipeline_mode<synchronous>, transform_indices = @transform_8, window_bounds = array<i64: 1, 128>}, {transform_indices = @transform_9, window_bounds = array<i64: 1, 8, 128>}]} {
    %c0 = arith.constant 0 : index
    %c0_0 = arith.constant 0 : index
    %c0_1 = arith.constant 0 : index
    %0 = vector.load %arg2[%c0, %c0_0, %c0_1] : memref<1x8x8xf32, #tpu.memory_space<vmem>>, vector<1x8x8xf32>
    %1 = vector.shape_cast %0 : vector<1x8x8xf32> to vector<8x8xf32>
    %c0_2 = arith.constant 0 : index
    %c0_3 = arith.constant 0 : index
    %c0_4 = arith.constant 0 : index
    %2 = vector.load %arg3[%c0_2, %c0_3, %c0_4] : memref<1x40x8xf32, #tpu.memory_space<vmem>>, vector<1x40x8xf32>
    %3 = vector.shape_cast %2 : vector<1x40x8xf32> to vector<40x8xf32>
    %4 = vector.extract_strided_slice %3 {offsets = [0, 0], sizes = [8, 8], strides = [1, 1]} : vector<40x8xf32> to vector<8x8xf32>
    %5 = arith.mulf %1, %4 : vector<8x8xf32>
    %6 = vector.extract_strided_slice %3 {offsets = [8, 0], sizes = [8, 8], strides = [1, 1]} : vector<40x8xf32> to vector<8x8xf32>
    %7 = arith.mulf %1, %6 : vector<8x8xf32>
    %8 = vector.extract_strided_slice %3 {offsets = [16, 0], sizes = [8, 8], strides = [1, 1]} : vector<40x8xf32> to vector<8x8xf32>
    %9 = arith.mulf %1, %8 : vector<8x8xf32>
    %10 = vector.extract_strided_slice %3 {offsets = [24, 0], sizes = [8, 8], strides = [1, 1]} : vector<40x8xf32> to vector<8x8xf32>
    %11 = arith.mulf %1, %10 : vector<8x8xf32>
    %12 = vector.extract_strided_slice %3 {offsets = [32, 0], sizes = [8, 8], strides = [1, 1]} : vector<40x8xf32> to vector<8x8xf32>
    %13 = arith.mulf %1, %12 : vector<8x8xf32>
    %14 = tpu.concatenate %5, %7, %9, %11, %13 in 0 : vector<8x8xf32>, vector<8x8xf32>, vector<8x8xf32>, vector<8x8xf32>, vector<8x8xf32> -> vector<40x8xf32>
    %c0_5 = arith.constant 0 : index
    %c0_6 = arith.constant 0 : index
    %c0_7 = arith.constant 0 : index
    %15 = vector.load %arg1[%c0_5, %c0_6, %c0_7] : memref<1x8x32xf32, #tpu.memory_space<vmem>>, vector<1x8x32xf32>
    %16 = vector.shape_cast %15 : vector<1x8x32xf32> to vector<8x32xf32>
    %cst = arith.constant dense<0.000000e+00> : vector<40x32xf32>
    %17 = tpu.matmul %14, %16, %cst {dimension_numbers = #tpu.dot_dimension_numbers<[1], [0], [0], [1], [0, 0, 1, 1], [], []>} : vector<40x8xf32>, vector<8x32xf32>, vector<40x32xf32> -> vector<40x32xf32>
    %cst_8 = arith.constant 0.000000e+00 : f32
    %18 = vector.broadcast %cst_8 : f32 to vector<8x32xf32>
    %19 = vector.extract_strided_slice %17 {offsets = [0, 0], sizes = [8, 32], strides = [1, 1]} : vector<40x32xf32> to vector<8x32xf32>
    %c0_9 = arith.constant 0 : index
    %c0_10 = arith.constant 0 : index
    %c0_11 = arith.constant 0 : index
    %20 = vector.load %arg4[%c0_9, %c0_10, %c0_11] : memref<5x32x32xf32, #tpu.memory_space<vmem>>, vector<1x32x32xf32>
    %21 = vector.shape_cast %20 : vector<1x32x32xf32> to vector<32x32xf32>
    %cst_12 = arith.constant dense<0.000000e+00> : vector<8x32xf32>
    %22 = tpu.matmul %19, %21, %cst_12 {dimension_numbers = #tpu.dot_dimension_numbers<[1], [0], [0], [1], [0, 0, 1, 1], [], []>} : vector<8x32xf32>, vector<32x32xf32>, vector<8x32xf32> -> vector<8x32xf32>
    %23 = arith.addf %18, %22 : vector<8x32xf32>
    %24 = vector.extract_strided_slice %17 {offsets = [8, 0], sizes = [8, 32], strides = [1, 1]} : vector<40x32xf32> to vector<8x32xf32>
    %c1 = arith.constant 1 : index
    %c0_13 = arith.constant 0 : index
    %c0_14 = arith.constant 0 : index
    %25 = vector.load %arg4[%c1, %c0_13, %c0_14] : memref<5x32x32xf32, #tpu.memory_space<vmem>>, vector<1x32x32xf32>
    %26 = vector.shape_cast %25 : vector<1x32x32xf32> to vector<32x32xf32>
    %cst_15 = arith.constant dense<0.000000e+00> : vector<8x32xf32>
    %27 = tpu.matmul %24, %26, %cst_15 {dimension_numbers = #tpu.dot_dimension_numbers<[1], [0], [0], [1], [0, 0, 1, 1], [], []>} : vector<8x32xf32>, vector<32x32xf32>, vector<8x32xf32> -> vector<8x32xf32>
    %28 = arith.addf %23, %27 : vector<8x32xf32>
    %29 = vector.extract_strided_slice %17 {offsets = [16, 0], sizes = [8, 32], strides = [1, 1]} : vector<40x32xf32> to vector<8x32xf32>
    %c2 = arith.constant 2 : index
    %c0_16 = arith.constant 0 : index
    %c0_17 = arith.constant 0 : index
    %30 = vector.load %arg4[%c2, %c0_16, %c0_17] : memref<5x32x32xf32, #tpu.memory_space<vmem>>, vector<1x32x32xf32>
    %31 = vector.shape_cast %30 : vector<1x32x32xf32> to vector<32x32xf32>
    %cst_18 = arith.constant dense<0.000000e+00> : vector<8x32xf32>
    %32 = tpu.matmul %29, %31, %cst_18 {dimension_numbers = #tpu.dot_dimension_numbers<[1], [0], [0], [1], [0, 0, 1, 1], [], []>} : vector<8x32xf32>, vector<32x32xf32>, vector<8x32xf32> -> vector<8x32xf32>
    %33 = arith.addf %28, %32 : vector<8x32xf32>
    %34 = vector.extract_strided_slice %17 {offsets = [24, 0], sizes = [8, 32], strides = [1, 1]} : vector<40x32xf32> to vector<8x32xf32>
    %c3 = arith.constant 3 : index
    %c0_19 = arith.constant 0 : index
    %c0_20 = arith.constant 0 : index
    %35 = vector.load %arg4[%c3, %c0_19, %c0_20] : memref<5x32x32xf32, #tpu.memory_space<vmem>>, vector<1x32x32xf32>
    %36 = vector.shape_cast %35 : vector<1x32x32xf32> to vector<32x32xf32>
    %cst_21 = arith.constant dense<0.000000e+00> : vector<8x32xf32>
    %37 = tpu.matmul %34, %36, %cst_21 {dimension_numbers = #tpu.dot_dimension_numbers<[1], [0], [0], [1], [0, 0, 1, 1], [], []>} : vector<8x32xf32>, vector<32x32xf32>, vector<8x32xf32> -> vector<8x32xf32>
    %38 = arith.addf %33, %37 : vector<8x32xf32>
    %39 = vector.extract_strided_slice %17 {offsets = [32, 0], sizes = [8, 32], strides = [1, 1]} : vector<40x32xf32> to vector<8x32xf32>
    %c4 = arith.constant 4 : index
    %c0_22 = arith.constant 0 : index
    %c0_23 = arith.constant 0 : index
    %40 = vector.load %arg4[%c4, %c0_22, %c0_23] : memref<5x32x32xf32, #tpu.memory_space<vmem>>, vector<1x32x32xf32>
    %41 = vector.shape_cast %40 : vector<1x32x32xf32> to vector<32x32xf32>
    %cst_24 = arith.constant dense<0.000000e+00> : vector<8x32xf32>
    %42 = tpu.matmul %39, %41, %cst_24 {dimension_numbers = #tpu.dot_dimension_numbers<[1], [0], [0], [1], [0, 0, 1, 1], [], []>} : vector<8x32xf32>, vector<32x32xf32>, vector<8x32xf32> -> vector<8x32xf32>
    %43 = arith.addf %38, %42 : vector<8x32xf32>
    %c0_25 = arith.constant 0 : index
    %c0_26 = arith.constant 0 : index
    %44 = vector.load %arg5[%c0_25, %c0_26] : memref<1x32xf32, #tpu.memory_space<vmem>>, vector<1x32xf32>
    %45 = vector.broadcast %44 : vector<1x32xf32> to vector<8x32xf32>
    %46 = arith.addf %43, %45 : vector<8x32xf32>
    %cst_27 = arith.constant 0.000000e+00 : f32
    %47 = vector.broadcast %cst_27 : f32 to vector<8x32xf32>
    %48 = arith.maximumf %46, %47 : vector<8x32xf32>
    %cst_28 = arith.constant dense<0.000000e+00> : vector<40x32xf32>
    %49 = tpu.matmul %14, %48, %cst_28 {dimension_numbers = #tpu.dot_dimension_numbers<[1], [0], [0], [1], [0, 0, 1, 1], [], []>} : vector<40x8xf32>, vector<8x32xf32>, vector<40x32xf32> -> vector<40x32xf32>
    %cst_29 = arith.constant 0.000000e+00 : f32
    %50 = vector.broadcast %cst_29 : f32 to vector<8x32xf32>
    %51 = vector.extract_strided_slice %49 {offsets = [0, 0], sizes = [8, 32], strides = [1, 1]} : vector<40x32xf32> to vector<8x32xf32>
    %c0_30 = arith.constant 0 : index
    %c0_31 = arith.constant 0 : index
    %c0_32 = arith.constant 0 : index
    %52 = vector.load %arg6[%c0_30, %c0_31, %c0_32] : memref<5x32x32xf32, #tpu.memory_space<vmem>>, vector<1x32x32xf32>
    %53 = vector.shape_cast %52 : vector<1x32x32xf32> to vector<32x32xf32>
    %cst_33 = arith.constant dense<0.000000e+00> : vector<8x32xf32>
    %54 = tpu.matmul %51, %53, %cst_33 {dimension_numbers = #tpu.dot_dimension_numbers<[1], [0], [0], [1], [0, 0, 1, 1], [], []>} : vector<8x32xf32>, vector<32x32xf32>, vector<8x32xf32> -> vector<8x32xf32>
    %55 = arith.addf %50, %54 : vector<8x32xf32>
    %56 = vector.extract_strided_slice %49 {offsets = [8, 0], sizes = [8, 32], strides = [1, 1]} : vector<40x32xf32> to vector<8x32xf32>
    %c1_34 = arith.constant 1 : index
    %c0_35 = arith.constant 0 : index
    %c0_36 = arith.constant 0 : index
    %57 = vector.load %arg6[%c1_34, %c0_35, %c0_36] : memref<5x32x32xf32, #tpu.memory_space<vmem>>, vector<1x32x32xf32>
    %58 = vector.shape_cast %57 : vector<1x32x32xf32> to vector<32x32xf32>
    %cst_37 = arith.constant dense<0.000000e+00> : vector<8x32xf32>
    %59 = tpu.matmul %56, %58, %cst_37 {dimension_numbers = #tpu.dot_dimension_numbers<[1], [0], [0], [1], [0, 0, 1, 1], [], []>} : vector<8x32xf32>, vector<32x32xf32>, vector<8x32xf32> -> vector<8x32xf32>
    %60 = arith.addf %55, %59 : vector<8x32xf32>
    %61 = vector.extract_strided_slice %49 {offsets = [16, 0], sizes = [8, 32], strides = [1, 1]} : vector<40x32xf32> to vector<8x32xf32>
    %c2_38 = arith.constant 2 : index
    %c0_39 = arith.constant 0 : index
    %c0_40 = arith.constant 0 : index
    %62 = vector.load %arg6[%c2_38, %c0_39, %c0_40] : memref<5x32x32xf32, #tpu.memory_space<vmem>>, vector<1x32x32xf32>
    %63 = vector.shape_cast %62 : vector<1x32x32xf32> to vector<32x32xf32>
    %cst_41 = arith.constant dense<0.000000e+00> : vector<8x32xf32>
    %64 = tpu.matmul %61, %63, %cst_41 {dimension_numbers = #tpu.dot_dimension_numbers<[1], [0], [0], [1], [0, 0, 1, 1], [], []>} : vector<8x32xf32>, vector<32x32xf32>, vector<8x32xf32> -> vector<8x32xf32>
    %65 = arith.addf %60, %64 : vector<8x32xf32>
    %66 = vector.extract_strided_slice %49 {offsets = [24, 0], sizes = [8, 32], strides = [1, 1]} : vector<40x32xf32> to vector<8x32xf32>
    %c3_42 = arith.constant 3 : index
    %c0_43 = arith.constant 0 : index
    %c0_44 = arith.constant 0 : index
    %67 = vector.load %arg6[%c3_42, %c0_43, %c0_44] : memref<5x32x32xf32, #tpu.memory_space<vmem>>, vector<1x32x32xf32>
    %68 = vector.shape_cast %67 : vector<1x32x32xf32> to vector<32x32xf32>
    %cst_45 = arith.constant dense<0.000000e+00> : vector<8x32xf32>
    %69 = tpu.matmul %66, %68, %cst_45 {dimension_numbers = #tpu.dot_dimension_numbers<[1], [0], [0], [1], [0, 0, 1, 1], [], []>} : vector<8x32xf32>, vector<32x32xf32>, vector<8x32xf32> -> vector<8x32xf32>
    %70 = arith.addf %65, %69 : vector<8x32xf32>
    %71 = vector.extract_strided_slice %49 {offsets = [32, 0], sizes = [8, 32], strides = [1, 1]} : vector<40x32xf32> to vector<8x32xf32>
    %c4_46 = arith.constant 4 : index
    %c0_47 = arith.constant 0 : index
    %c0_48 = arith.constant 0 : index
    %72 = vector.load %arg6[%c4_46, %c0_47, %c0_48] : memref<5x32x32xf32, #tpu.memory_space<vmem>>, vector<1x32x32xf32>
    %73 = vector.shape_cast %72 : vector<1x32x32xf32> to vector<32x32xf32>
    %cst_49 = arith.constant dense<0.000000e+00> : vector<8x32xf32>
    %74 = tpu.matmul %71, %73, %cst_49 {dimension_numbers = #tpu.dot_dimension_numbers<[1], [0], [0], [1], [0, 0, 1, 1], [], []>} : vector<8x32xf32>, vector<32x32xf32>, vector<8x32xf32> -> vector<8x32xf32>
    %75 = arith.addf %70, %74 : vector<8x32xf32>
    %c0_50 = arith.constant 0 : index
    %c0_51 = arith.constant 0 : index
    %76 = vector.load %arg7[%c0_50, %c0_51] : memref<1x32xf32, #tpu.memory_space<vmem>>, vector<1x32xf32>
    %77 = vector.broadcast %76 : vector<1x32xf32> to vector<8x32xf32>
    %78 = arith.addf %75, %77 : vector<8x32xf32>
    %cst_52 = arith.constant 0.000000e+00 : f32
    %79 = vector.broadcast %cst_52 : f32 to vector<8x32xf32>
    %80 = arith.maximumf %78, %79 : vector<8x32xf32>
    %c0_53 = arith.constant 0 : index
    %c0_54 = arith.constant 0 : index
    %81 = vector.load %arg8[%c0_53, %c0_54] : memref<32x128xf32, #tpu.memory_space<vmem>>, vector<32x128xf32>
    %cst_55 = arith.constant dense<0.000000e+00> : vector<8x128xf32>
    %82 = tpu.matmul %80, %81, %cst_55 {dimension_numbers = #tpu.dot_dimension_numbers<[1], [0], [0], [1], [0, 0, 1, 1], [], []>} : vector<8x32xf32>, vector<32x128xf32>, vector<8x128xf32> -> vector<8x128xf32>
    %c0_56 = arith.constant 0 : index
    %c0_57 = arith.constant 0 : index
    %83 = vector.load %arg9[%c0_56, %c0_57] : memref<1x128xf32, #tpu.memory_space<vmem>>, vector<1x128xf32>
    %84 = vector.broadcast %83 : vector<1x128xf32> to vector<8x128xf32>
    %85 = arith.addf %82, %84 : vector<8x128xf32>
    %c0_58 = arith.constant 0 : index
    %c0_59 = arith.constant 0 : index
    %c0_60 = arith.constant 0 : index
    %86 = vector.load %arg10[%c0_58, %c0_59, %c0_60] : memref<1x8x128xf32, #tpu.memory_space<vmem>>, vector<1x8x128xf32>
    %87 = vector.shape_cast %86 : vector<1x8x128xf32> to vector<8x128xf32>
    %88 = vector.shape_cast %85 : vector<8x128xf32> to vector<1x8x128xf32>
    tpu.vector_store %arg10[%c0_58, %c0_59, %c0_60], %88 {strides = array<i32>} : memref<1x8x128xf32, #tpu.memory_space<vmem>>, vector<1x8x128xf32>,
    return
  }
  func.func @transform_0(%arg0: i32) -> (i32, i32, i32) {
    %c0_i32 = arith.constant 0 : i32
    %c0_i32_0 = arith.constant 0 : i32
    %c0_i32_1 = arith.constant 0 : i32
    return %arg0, %c0_i32, %c0_i32_0 : i32, i32, i32
  }
  func.func @transform_1(%arg0: i32) -> (i32, i32, i32) {
    %c0_i32 = arith.constant 0 : i32
    %c0_i32_0 = arith.constant 0 : i32
    %c0_i32_1 = arith.constant 0 : i32
    return %arg0, %c0_i32, %c0_i32_0 : i32, i32, i32
  }
  func.func @transform_2(%arg0: i32) -> (i32, i32, i32) {
    %c0_i32 = arith.constant 0 : i32
    %c0_i32_0 = arith.constant 0 : i32
    %c0_i32_1 = arith.constant 0 : i32
    return %arg0, %c0_i32, %c0_i32_0 : i32, i32, i32
  }
  func.func @transform_3(%arg0: i32) -> (i32, i32, i32) {
    %c0_i32 = arith.constant 0 : i32
    %c0_i32_0 = arith.constant 0 : i32
    %c0_i32_1 = arith.constant 0 : i32
    %c0_i32_2 = arith.constant 0 : i32
    return %c0_i32, %c0_i32_0, %c0_i32_1 : i32, i32, i32
  }
  func.func @transform_4(%arg0: i32) -> (i32, i32) {
    %c0_i32 = arith.constant 0 : i32
    %c0_i32_0 = arith.constant 0 : i32
    %c0_i32_1 = arith.constant 0 : i32
    return %c0_i32, %c0_i32_0 : i32, i32
  }
  func.func @transform_5(%arg0: i32) -> (i32, i32, i32) {
    %c0_i32 = arith.constant 0 : i32
    %c0_i32_0 = arith.constant 0 : i32
    %c0_i32_1 = arith.constant 0 : i32
    %c0_i32_2 = arith.constant 0 : i32
    return %c0_i32, %c0_i32_0, %c0_i32_1 : i32, i32, i32
  }
  func.func @transform_6(%arg0: i32) -> (i32, i32) {
    %c0_i32 = arith.constant 0 : i32
    %c0_i32_0 = arith.constant 0 : i32
    %c0_i32_1 = arith.constant 0 : i32
    return %c0_i32, %c0_i32_0 : i32, i32
  }
  func.func @transform_7(%arg0: i32) -> (i32, i32) {
    %c0_i32 = arith.constant 0 : i32
    %c0_i32_0 = arith.constant 0 : i32
    %c0_i32_1 = arith.constant 0 : i32
    return %c0_i32, %c0_i32_0 : i32, i32
  }
  func.func @transform_8(%arg0: i32) -> (i32, i32) {
    %c0_i32 = arith.constant 0 : i32
    %c0_i32_0 = arith.constant 0 : i32
    %c0_i32_1 = arith.constant 0 : i32
    return %c0_i32, %c0_i32_0 : i32, i32
  }
  func.func @transform_9(%arg0: i32) -> (i32, i32, i32) {
    %c0_i32 = arith.constant 0 : i32
    %c0_i32_0 = arith.constant 0 : i32
    %c0_i32_1 = arith.constant 0 : i32
    return %arg0, %c0_i32, %c0_i32_0 : i32, i32, i32
  }
}

</mosaic_0001>

<llo_original>
// kernel: tpu_custom_call.1
$region0: #{tpu_custom_call.1}
  #allocation0 [shape = 'u32[]', space=smem, size = 0x4, offset = 0x4, fixed_abs, tag = 'smem constant byte address 0x4 - core index']
  #allocation1 [shape = 'u32[144,128]{1,0:T(1,128)}', space=vmem, size = 0x12000, scoped, tag = 'internal scratch']
  %s0 = inlined_call_operand.vmem [shape: f32[2,8,32], index: 0, kind: input, shape index: {}]
  %s1 = inlined_call_operand.vmem [shape: f32[2,8,8], index: 1, kind: input, shape index: {}]
  %s2 = inlined_call_operand.vmem [shape: f32[2,40,8], index: 2, kind: input, shape index: {}]
  %s3 = inlined_call_operand.hbm [shape: f32[5,32,32], index: 3, kind: input, shape index: {}]
  %s4 = inlined_call_operand.vmem [shape: f32[1,32], index: 4, kind: input, shape index: {}]
  %s5 = inlined_call_operand.hbm [shape: f32[5,32,32], index: 5, kind: input, shape index: {}]
  %s6 = inlined_call_operand.vmem [shape: f32[1,32], index: 6, kind: input, shape index: {}]
  %s7 = inlined_call_operand.vmem [shape: f32[32,128], index: 7, kind: input, shape index: {}]
  %s8 = inlined_call_operand.vmem [shape: f32[1,128], index: 8, kind: input, shape index: {}]
  %s9 = inlined_call_operand.hbm [shape: f32[2,8,128], index: 9, kind: output, shape index: {}]
  %s10 = sld [smem:[#allocation0]]
  $region77: #{tpu_custom_call.1} parent=0
    _
  %s12 = ssub.s32 1, %s10
  %s13 = scalar_select 0, %s12, %s10
  $region1: #{tpu_custom_call.1} parent=0
    #allocation2 [shape = 'u8[81920]{0}', space=vmem, size = 0x14000, scoped, tag = 'input window, operand 3, single buffered']
    #allocation3 [shape = 's32[2]{0}', space=sflag, size = 0x8, scoped, tag = 'scoped memory for tpu_custom_call.1']
    #allocation4 [shape = 's32[2]{0}', space=sflag, size = 0x8, scoped, tag = 'scoped memory for tpu_custom_call.1']
    #allocation5 [shape = 'u8[81920]{0}', space=vmem, size = 0x14000, scoped, tag = 'input window, operand 5, single buffered']
    #allocation6 [shape = 's32[1]{0}', space=sflag, size = 0x4, scoped, tag = 'scoped memory for tpu_custom_call.1']
    #allocation7 [shape = 'u8[8192]{0}', space=vmem, size = 0x2000, scoped, tag = 'output window, operand 0']
    %14 = vsyncpa [#allocation3], 0
    %15 = vsyncpa [#allocation6], 0
    %16 = vsyncpa [#allocation4], 0
    %s17 = scalar_lea.sflag [#allocation4], 1
    %18 = vsyncpa %s17, 0
    loop: start=0, step=1, limit=4
    $region2: #{tpu_custom_call.1} parent=1 // loop_pre_header
      _
    $region3: #{tpu_custom_call.1} parent=1 // loop_header
      %s20 = sphi 0, %s24
      %p21 = scmp.ge.s32.totalorder %s20, 4
      %s30 = sphi 0, %s32
      %s33 = sphi 0, %s30
      %s34 = sphi 0, %s33
      %s50 = sphi 0, %s34
      %s56 = sphi 0, %s58
      %s59 = sphi 0, %s56
      %s60 = sphi 0, %s59
      %s76 = sphi 0, %s60
      %s82 = sphi 0, %s84
      %s85 = sphi 0, %s82
      %s86 = sphi 0, %s85
      %s102 = sphi 0, %s86
      %s106 = sphi 0, %s106
      %s108 = sphi 0, %s106
      %s109 = sphi 0, %s108
      %s123 = sphi 0, %s109
      %s127 = sphi 0, %s127
      %s129 = sphi 0, %s127
      %s130 = sphi 0, %s129
      %s144 = sphi 0, %s130
      %s148 = sphi 0, %s148
      %s150 = sphi 0, %s148
      %s151 = sphi 0, %s150
      %s165 = sphi 0, %s151
      %s169 = sphi 0, %s169
      %s171 = sphi 0, %s169
      %s172 = sphi 0, %s171
      %s186 = sphi 0, %s172
      %s190 = sphi 0, %s190
      %s192 = sphi 0, %s190
      %s193 = sphi 0, %s192
      %s207 = sphi 0, %s193
      %s211 = sphi 0, %s211
      %s213 = sphi 0, %s211
      %s214 = sphi 0, %s213
      %s228 = sphi 0, %s214
      %s234 = sphi 0, %s236
      %s237 = sphi 0, %s234
      %s238 = sphi 0, %s237
      %s254 = sphi 0, %s238
    $region4: #{tpu_custom_call.1} parent=1 // loop_header_branch
      %23 = sbr.rel (%p21) target = $region8
    $region5: #{tpu_custom_call.1} parent=1 // loop_body
      %s25 = ssub.s32 %s20, 1
      %s26 = ssub.s32 %s20, 2
      %s27 = sadd.s32 %s20, 1
      %s28 = ssub.s32 %s20, %s27
      %p29 = scmp.eq.s32.totalorder %s28, 0
      %s31 = sadd.s32 %s30, 1
      %s32 = scalar_select %p29, %s30, %s31
      %p35 = pneg %p29
      %p36 = scmp.eq.s32.totalorder %s20, 1
      %p37 = por %p35, %p36
      %p38 = scmp.ne.s32.totalorder %s30, %s33
      %p39 = scmp.eq.s32.totalorder %s20, 0
      %p40 = por %p38, %p39
      %p41 = scmp.ne.s32.totalorder %s30, %s33
      %p42 = scmp.eq.s32.totalorder %s25, 1
      %p43 = por %p41, %p42
      %p44 = scmp.ne.s32.totalorder %s33, %s34
      %p45 = scmp.eq.s32.totalorder %s25, 0
      %p46 = por %p44, %p45
      %p47 = scmp.ne.s32.totalorder %s33, %s34
      %p48 = scmp.eq.s32.totalorder %s26, 1
      %p49 = por %p47, %p48
      %p51 = scmp.ne.s32.totalorder %s34, %s50
      %p52 = scmp.eq.s32.totalorder %s26, 0
      %p53 = por %p51, %p52
      %s54 = ssub.s32 %s20, %s27
      %p55 = scmp.eq.s32.totalorder %s54, 0
      %s57 = sadd.s32 %s56, 1
      %s58 = scalar_select %p55, %s56, %s57
      %p61 = pneg %p55
      %p62 = scmp.eq.s32.totalorder %s20, 1
      %p63 = por %p61, %p62
      %p64 = scmp.ne.s32.totalorder %s56, %s59
      %p65 = scmp.eq.s32.totalorder %s20, 0
      %p66 = por %p64, %p65
      %p67 = scmp.ne.s32.totalorder %s56, %s59
      %p68 = scmp.eq.s32.totalorder %s25, 1
      %p69 = por %p67, %p68
      %p70 = scmp.ne.s32.totalorder %s59, %s60
      %p71 = scmp.eq.s32.totalorder %s25, 0
      %p72 = por %p70, %p71
      %p73 = scmp.ne.s32.totalorder %s59, %s60
      %p74 = scmp.eq.s32.totalorder %s26, 1
      %p75 = por %p73, %p74
      %p77 = scmp.ne.s32.totalorder %s60, %s76
      %p78 = scmp.eq.s32.totalorder %s26, 0
      %p79 = por %p77, %p78
      %s80 = ssub.s32 %s20, %s27
      %p81 = scmp.eq.s32.totalorder %s80, 0
      %s83 = sadd.s32 %s82, 1
      %s84 = scalar_select %p81, %s82, %s83
      %p87 = pneg %p81
      %p88 = scmp.eq.s32.totalorder %s20, 1
      %p89 = por %p87, %p88
      %p90 = scmp.ne.s32.totalorder %s82, %s85
      %p91 = scmp.eq.s32.totalorder %s20, 0
      %p92 = por %p90, %p91
      %p93 = scmp.ne.s32.totalorder %s82, %s85
      %p94 = scmp.eq.s32.totalorder %s25, 1
      %p95 = por %p93, %p94
      %p96 = scmp.ne.s32.totalorder %s85, %s86
      %p97 = scmp.eq.s32.totalorder %s25, 0
      %p98 = por %p96, %p97
      %p99 = scmp.ne.s32.totalorder %s85, %s86
      %p100 = scmp.eq.s32.totalorder %s26, 1
      %p101 = por %p99, %p100
      %p103 = scmp.ne.s32.totalorder %s86, %s102
      %p104 = scmp.eq.s32.totalorder %s26, 0
      %p105 = por %p103, %p104
      %s107 = sadd.s32 %s106, 1
      %p110 = scmp.eq.s32.totalorder %s20, 1
      %p111 = scmp.ne.s32.totalorder %s106, %s108
      %p112 = scmp.eq.s32.totalorder %s20, 0
      %p113 = por %p111, %p112
      %p114 = scmp.ne.s32.totalorder %s106, %s108
      %p115 = scmp.eq.s32.totalorder %s25, 1
      %p116 = por %p114, %p115
      %p117 = scmp.ne.s32.totalorder %s108, %s109
      %p118 = scmp.eq.s32.totalorder %s25, 0
      %p119 = por %p117, %p118
      %p120 = scmp.ne.s32.totalorder %s108, %s109
      %p121 = scmp.eq.s32.totalorder %s26, 1
      %p122 = por %p120, %p121
      %p124 = scmp.ne.s32.totalorder %s109, %s123
      %p125 = scmp.eq.s32.totalorder %s26, 0
      %p126 = por %p124, %p125
      %s128 = sadd.s32 %s127, 1
      %p131 = scmp.eq.s32.totalorder %s20, 1
      %p132 = scmp.ne.s32.totalorder %s127, %s129
      %p133 = scmp.eq.s32.totalorder %s20, 0
      %p134 = por %p132, %p133
      %p135 = scmp.ne.s32.totalorder %s127, %s129
      %p136 = scmp.eq.s32.totalorder %s25, 1
      %p137 = por %p135, %p136
      %p138 = scmp.ne.s32.totalorder %s129, %s130
      %p139 = scmp.eq.s32.totalorder %s25, 0
      %p140 = por %p138, %p139
      %p141 = scmp.ne.s32.totalorder %s129, %s130
      %p142 = scmp.eq.s32.totalorder %s26, 1
      %p143 = por %p141, %p142
      %p145 = scmp.ne.s32.totalorder %s130, %s144
      %p146 = scmp.eq.s32.totalorder %s26, 0
      %p147 = por %p145, %p146
      %s149 = sadd.s32 %s148, 1
      %p152 = scmp.eq.s32.totalorder %s20, 1
      %p153 = scmp.ne.s32.totalorder %s148, %s150
      %p154 = scmp.eq.s32.totalorder %s20, 0
      %p155 = por %p153, %p154
      %p156 = scmp.ne.s32.totalorder %s148, %s150
      %p157 = scmp.eq.s32.totalorder %s25, 1
      %p158 = por %p156, %p157
      %p159 = scmp.ne.s32.totalorder %s150, %s151
      %p160 = scmp.eq.s32.totalorder %s25, 0
      %p161 = por %p159, %p160
      %p162 = scmp.ne.s32.totalorder %s150, %s151
      %p163 = scmp.eq.s32.totalorder %s26, 1
      %p164 = por %p162, %p163
      %p166 = scmp.ne.s32.totalorder %s151, %s165
      %p167 = scmp.eq.s32.totalorder %s26, 0
      %p168 = por %p166, %p167
      %s170 = sadd.s32 %s169, 1
      %p173 = scmp.eq.s32.totalorder %s20, 1
      %p174 = scmp.ne.s32.totalorder %s169, %s171
      %p175 = scmp.eq.s32.totalorder %s20, 0
      %p176 = por %p174, %p175
      %p177 = scmp.ne.s32.totalorder %s169, %s171
      %p178 = scmp.eq.s32.totalorder %s25, 1
      %p179 = por %p177, %p178
      %p180 = scmp.ne.s32.totalorder %s171, %s172
      %p181 = scmp.eq.s32.totalorder %s25, 0
      %p182 = por %p180, %p181
      %p183 = scmp.ne.s32.totalorder %s171, %s172
      %p184 = scmp.eq.s32.totalorder %s26, 1
      %p185 = por %p183, %p184
      %p187 = scmp.ne.s32.totalorder %s172, %s186
      %p188 = scmp.eq.s32.totalorder %s26, 0
      %p189 = por %p187, %p188
      %s191 = sadd.s32 %s190, 1
      %p194 = scmp.eq.s32.totalorder %s20, 1
      %p195 = scmp.ne.s32.totalorder %s190, %s192
      %p196 = scmp.eq.s32.totalorder %s20, 0
      %p197 = por %p195, %p196
      %p198 = scmp.ne.s32.totalorder %s190, %s192
      %p199 = scmp.eq.s32.totalorder %s25, 1
      %p200 = por %p198, %p199
      %p201 = scmp.ne.s32.totalorder %s192, %s193
      %p202 = scmp.eq.s32.totalorder %s25, 0
      %p203 = por %p201, %p202
      %p204 = scmp.ne.s32.totalorder %s192, %s193
      %p205 = scmp.eq.s32.totalorder %s26, 1
      %p206 = por %p204, %p205
      %p208 = scmp.ne.s32.totalorder %s193, %s207
      %p209 = scmp.eq.s32.totalorder %s26, 0
      %p210 = por %p208, %p209
      %s212 = sadd.s32 %s211, 1
      %p215 = scmp.eq.s32.totalorder %s20, 1
      %p216 = scmp.ne.s32.totalorder %s211, %s213
      %p217 = scmp.eq.s32.totalorder %s20, 0
      %p218 = por %p216, %p217
      %p219 = scmp.ne.s32.totalorder %s211, %s213
      %p220 = scmp.eq.s32.totalorder %s25, 1
      %p221 = por %p219, %p220
      %p222 = scmp.ne.s32.totalorder %s213, %s214
      %p223 = scmp.eq.s32.totalorder %s25, 0
      %p224 = por %p222, %p223
      %p225 = scmp.ne.s32.totalorder %s213, %s214
      %p226 = scmp.eq.s32.totalorder %s26, 1
      %p227 = por %p225, %p226
      %p229 = scmp.ne.s32.totalorder %s214, %s228
      %p230 = scmp.eq.s32.totalorder %s26, 0
      %p231 = por %p229, %p230
      %s232 = ssub.s32 %s20, %s27
      %p233 = scmp.eq.s32.totalorder %s232, 0
      %s235 = sadd.s32 %s234, 1
      %s236 = scalar_select %p233, %s234, %s235
      %p239 = pneg %p233
      %p240 = scmp.eq.s32.totalorder %s20, 1
      %p241 = por %p239, %p240
      %p242 = scmp.ne.s32.totalorder %s234, %s237
      %p243 = scmp.eq.s32.totalorder %s20, 0
      %p244 = por %p242, %p243
      %p245 = scmp.ne.s32.totalorder %s234, %s237
      %p246 = scmp.eq.s32.totalorder %s25, 1
      %p247 = por %p245, %p246
      %p248 = scmp.ne.s32.totalorder %s237, %s238
      %p249 = scmp.eq.s32.totalorder %s25, 0
      %p250 = por %p248, %p249
      %p251 = scmp.ne.s32.totalorder %s237, %s238
      %p252 = scmp.eq.s32.totalorder %s26, 1
      %p253 = por %p251, %p252
      %p255 = scmp.ne.s32.totalorder %s238, %s254
      %p256 = scmp.eq.s32.totalorder %s26, 0
      %p257 = por %p255, %p256
      %p258 = scmp.le.s32.totalorder 1, %s20
      %p259 = scmp.lt.s32.totalorder %s20, 3
      %p260 = pnand %p258, %p259
      %p261 = pneg %p260
      // Predicated region
      $region9: #{tpu_custom_call.1} parent=5 // pred_check
        _
      $region10: #{tpu_custom_call.1} parent=5 // pred_check_branch
        %263 = sbr.rel (%p260) target = $region12
      $region11: #{tpu_custom_call.1} parent=5 // pred_region
        %s264 = ssub.s32 %s20, 1
        // Predicated region
        $region13: #{tpu_custom_call.1} parent=11 // pred_check
          %p265 = pneg %p119
        $region14: #{tpu_custom_call.1} parent=11 // pred_check_branch
          %267 = sbr.rel (%p265) target = $region16
        $region15: #{tpu_custom_call.1} parent=11 // pred_region
          %s269 = ssub.s32 2560, 2560
          %270 = vsyncadd [#allocation3], %s269
          %s271 = sshll.u32 [#allocation2], 4
          %s272 = int_to_ptr.vmem [resolvable:$true] %s271
          %277 = dma.hbm_to_vmem [thread:$0]  %s3, 2560, %s272, [#allocation3], 128, 128, 8
        $region16: #{tpu_custom_call.1} parent=11 // pred_fallthru
          _
        // Predicated region
        $region17: #{tpu_custom_call.1} parent=11 // pred_check
          %p278 = pneg %p140
        $region18: #{tpu_custom_call.1} parent=11 // pred_check_branch
          %280 = sbr.rel (%p278) target = $region20
        $region19: #{tpu_custom_call.1} parent=11 // pred_region
          _
        $region20: #{tpu_custom_call.1} parent=11 // pred_fallthru
          _
        // Predicated region
        $region21: #{tpu_custom_call.1} parent=11 // pred_check
          %p281 = pneg %p161
        $region22: #{tpu_custom_call.1} parent=11 // pred_check_branch
          %283 = sbr.rel (%p281) target = $region24
        $region23: #{tpu_custom_call.1} parent=11 // pred_region
          %s285 = ssub.s32 2560, 2560
          %286 = vsyncadd [#allocation6], %s285
          %s287 = sshll.u32 [#allocation5], 4
          %s288 = int_to_ptr.vmem [resolvable:$true] %s287
          %293 = dma.hbm_to_vmem [thread:$0]  %s5, 2560, %s288, [#allocation6], 128, 128, 8
        $region24: #{tpu_custom_call.1} parent=11 // pred_fallthru
          _
        // Predicated region
        $region25: #{tpu_custom_call.1} parent=11 // pred_check
          %p294 = pneg %p182
        $region26: #{tpu_custom_call.1} parent=11 // pred_check_branch
          %296 = sbr.rel (%p294) target = $region28
        $region27: #{tpu_custom_call.1} parent=11 // pred_region
          _
        $region28: #{tpu_custom_call.1} parent=11 // pred_fallthru
          _
        // Predicated region
        $region29: #{tpu_custom_call.1} parent=11 // pred_check
          %p297 = pneg %p203
        $region30: #{tpu_custom_call.1} parent=11 // pred_check_branch
          %299 = sbr.rel (%p297) target = $region32
        $region31: #{tpu_custom_call.1} parent=11 // pred_region
          _
        $region32: #{tpu_custom_call.1} parent=11 // pred_fallthru
          _
        // Predicated region
        $region33: #{tpu_custom_call.1} parent=11 // pred_check
          %p300 = pneg %p224
        $region34: #{tpu_custom_call.1} parent=11 // pred_check_branch
          %302 = sbr.rel (%p300) target = $region36
        $region35: #{tpu_custom_call.1} parent=11 // pred_region
          _
        $region36: #{tpu_custom_call.1} parent=11 // pred_fallthru
          _
      $region12: #{tpu_custom_call.1} parent=5 // pred_fallthru
        _
      %p303 = scmp.lt.s32.totalorder %s20, 2
      // Predicated region
      $region37: #{tpu_custom_call.1} parent=5 // pred_check
        %p304 = pneg %p303
      $region38: #{tpu_custom_call.1} parent=5 // pred_check_branch
        %306 = sbr.rel (%p304) target = $region40
      $region39: #{tpu_custom_call.1} parent=5 // pred_region
        // Predicated region
        $region41: #{tpu_custom_call.1} parent=39 // pred_check
          %p307 = pneg %p40
        $region42: #{tpu_custom_call.1} parent=39 // pred_check_branch
          %309 = sbr.rel (%p307) target = $region44
        $region43: #{tpu_custom_call.1} parent=39 // pred_region
          %p310 = scmp.lt.s32.totalorder %s20, 1
          %s311 = scalar_select %p310, %s20, 1
          %s312 = smul.addr %s311, 8
          %s313 = scalar_lea.vmem %s0, %s312
        $region44: #{tpu_custom_call.1} parent=39 // pred_fallthru
          _
        // Predicated region
        $region45: #{tpu_custom_call.1} parent=39 // pred_check
          %p314 = pneg %p66
        $region46: #{tpu_custom_call.1} parent=39 // pred_check_branch
          %316 = sbr.rel (%p314) target = $region48
        $region47: #{tpu_custom_call.1} parent=39 // pred_region
          %p317 = scmp.lt.s32.totalorder %s20, 1
          %s318 = scalar_select %p317, %s20, 1
          %s319 = smul.addr %s318, 8
          %s320 = scalar_lea.vmem %s1, %s319
        $region48: #{tpu_custom_call.1} parent=39 // pred_fallthru
          _
        // Predicated region
        $region49: #{tpu_custom_call.1} parent=39 // pred_check
          %p321 = pneg %p92
        $region50: #{tpu_custom_call.1} parent=39 // pred_check_branch
          %323 = sbr.rel (%p321) target = $region52
        $region51: #{tpu_custom_call.1} parent=39 // pred_region
          %p324 = scmp.lt.s32.totalorder %s20, 1
          %s325 = scalar_select %p324, %s20, 1
          %s326 = smul.addr %s325, 5
          %s327 = smul.addr %s326, 8
          %s328 = scalar_lea.vmem %s2, %s327
        $region52: #{tpu_custom_call.1} parent=39 // pred_fallthru
          _
      $region40: #{tpu_custom_call.1} parent=5 // pred_fallthru
        _
      %p329 = scmp.le.s32.totalorder 1, %s20
      %p330 = scmp.lt.s32.totalorder %s20, 3
      %p331 = pnand %p329, %p330
      %p332 = pneg %p331
      // Predicated region
      $region53: #{tpu_custom_call.1} parent=5 // pred_check
        _
      $region54: #{tpu_custom_call.1} parent=5 // pred_check_branch
        %334 = sbr.rel (%p331) target = $region56
      $region55: #{tpu_custom_call.1} parent=5 // pred_region
        %s335 = ssub.s32 %s20, 1
        // Predicated region
        $region57: #{tpu_custom_call.1} parent=55 // pred_check
          %p336 = pneg %p119
        $region58: #{tpu_custom_call.1} parent=55 // pred_check_branch
          %338 = sbr.rel (%p336) target = $region60
        $region59: #{tpu_custom_call.1} parent=55 // pred_region
          %339 = dma.done [#allocation3], 2560
        $region60: #{tpu_custom_call.1} parent=55 // pred_fallthru
          _
        // Predicated region
        $region61: #{tpu_custom_call.1} parent=55 // pred_check
          %p340 = pneg %p161
        $region62: #{tpu_custom_call.1} parent=55 // pred_check_branch
          %342 = sbr.rel (%p340) target = $region64
        $region63: #{tpu_custom_call.1} parent=55 // pred_region
          %343 = dma.done [#allocation6], 2560
        $region64: #{tpu_custom_call.1} parent=55 // pred_fallthru
          _
        %p344 = scmp.lt.s32.totalorder %s25, 1
        %s345 = scalar_select %p344, %s25, 1
        %s346 = smul.addr %s345, 8
        %s347 = scalar_lea.vmem %s0, %s346
        %p348 = pneg %p46
        %p349 = pneg %p43
        %p350 = scmp.lt.s32.totalorder %s25, 1
        %s351 = scalar_select %p350, %s25, 1
        %s352 = smul.addr %s351, 8
        %s353 = scalar_lea.vmem %s1, %s352
        %p354 = pneg %p72
        %p355 = pneg %p69
        %p356 = scmp.lt.s32.totalorder %s25, 1
        %s357 = scalar_select %p356, %s25, 1
        %s358 = smul.addr %s357, 5
        %s359 = smul.addr %s358, 8
        %s360 = scalar_lea.vmem %s2, %s359
        %p361 = pneg %p98
        %p362 = pneg %p95
        %p363 = pneg %p119
        %p364 = pneg %p116
        %p365 = pneg %p140
        %p366 = pneg %p137
        %p367 = pneg %p161
        %p368 = pneg %p158
        %p369 = pneg %p182
        %p370 = pneg %p179
        %p371 = pneg %p203
        %p372 = pneg %p200
        %p373 = pneg %p224
        %p374 = pneg %p221
        %p375 = pneg %p250
        %p376 = pneg %p247
        %s377 = sand.u32 %s237, 1
        %s378 = scalar_lea.sflag [#allocation4], %s377
        %s379 = sand.u32 %s237, 1
        %s380 = smul.addr %s379, 8
        %s381 = scalar_lea.vmem [#allocation7], %s380
        %p382 = scmp.lt.s32.totalorder %s25, 1
        %s383 = scalar_select %p382, %s25, 1
        %s384 = smul.addr %s383, 8
        %s385 = scalar_lea.vmem %s0, %s384
        %p386 = scmp.lt.s32.totalorder %s25, 1
        %s387 = scalar_select %p386, %s25, 1
        %s388 = smul.addr %s387, 8
        %s389 = scalar_lea.vmem %s1, %s388
        %p390 = scmp.lt.s32.totalorder %s25, 1
        %s391 = scalar_select %p390, %s25, 1
        %s392 = smul.addr %s391, 5
        %s393 = smul.addr %s392, 8
        %s394 = scalar_lea.vmem %s2, %s393
        %v395 = vld [vmem:[%s389] sm:$0xff]
        %v396 = vld [vmem:[%s394] sm:$0xff]
        %v397 = vld [vmem:[%s394 + $0x8] sm:$0xff]
        %v398 = vld [vmem:[%s394 + $0x10] sm:$0xff]
        %v399 = vld [vmem:[%s394 + $0x18] sm:$0xff]
        %v400 = vld [vmem:[%s394 + $0x20] sm:$0xff]
        %v401 = vmul.f32 %v395, %v396
        %v402 = vmul.f32 %v395, %v397
        %v403 = vmul.f32 %v395, %v398
        %v404 = vmul.f32 %v395, %v399
        %v405 = vmul.f32 %v395, %v400
        %v406 = vld [vmem:[%s385] sm:$0xff]
        %vm407 = vcmask 64512
        %v409 = vsel %vm407, %v401, 0
        %v412 = vsel %vm407, %v402, 0
        %v415 = vsel %vm407, %v403, 0
        %v418 = vsel %vm407, %v404, 0
        %v421 = vsel %vm407, %v405, 0
        %423 = vmatprep.subr.mxu0 0.0
        %424 = vmatpush1.msra.mxu0 %v406
        %425 = vmatprep.subr.mxu0 0.0
        %426 = vmatpush1.msra.mxu0 0.0
        %427 = vmatprep.subr.mxu0 0.0
        %428 = vmatpush1.msra.mxu0 0.0
        %429 = vmatprep.subr.mxu0 0.0
        %430 = vmatpush1.msra.mxu0 0.0
        %431 = vmatprep.subr.mxu0 0.0
        %432 = vmatpush1.msra.mxu0 0.0
        %433 = vmatprep.subr.mxu0 0.0
        %434 = vmatpush1.msra.mxu0 0.0
        %435 = vmatprep.subr.mxu0 0.0
        %436 = vmatpush1.msra.mxu0 0.0
        %437 = vmatprep.subr.mxu0 0.0
        %438 = vmatpush1.msra.mxu0 0.0
        %439 = vmatprep.subr.mxu0 0.0
        %440 = vmatpush1.msra.mxu0 0.0
        %441 = vmatprep.subr.mxu0 0.0
        %442 = vmatpush1.msra.mxu0 0.0
        %443 = vmatprep.subr.mxu0 0.0
        %444 = vmatpush1.msra.mxu0 0.0
        %445 = vmatprep.subr.mxu0 0.0
        %446 = vmatpush1.msra.mxu0 0.0
        %447 = vmatprep.subr.mxu0 0.0
        %448 = vmatpush1.msra.mxu0 0.0
        %449 = vmatprep.subr.mxu0 0.0
        %450 = vmatpush1.msra.mxu0 0.0
        %451 = vmatprep.subr.mxu0 0.0
        %452 = vmatpush1.msra.mxu0 0.0
        %453 = vmatprep.subr.mxu0 0.0
        %454 = vmatpush1.msra.mxu0 0.0
        %455 = vmatprep.subr.mxu0 0.0
        %456 = vmatpush1.msra.mxu0 0.0
        %457 = vmatprep.subr.mxu0 0.0
        %458 = vmatpush1.msra.mxu0 0.0
        %459 = vmatprep.subr.mxu0 0.0
        %460 = vmatpush1.msra.mxu0 0.0
        %461 = vmatprep.subr.mxu0 0.0
        %462 = vmatpush1.msra.mxu0 0.0
        %463 = vmatprep.subr.mxu0 0.0
        %464 = vmatpush1.msra.mxu0 0.0
        %465 = vmatprep.subr.mxu0 0.0
        %466 = vmatpush1.msra.mxu0 0.0
        %467 = vmatprep.subr.mxu0 0.0
        %468 = vmatpush1.msra.mxu0 0.0
        %469 = vmatprep.subr.mxu0 0.0
        %470 = vmatpush1.msra.mxu0 0.0
        %471 = vmatprep.subr.mxu0 0.0
        %472 = vmatpush1.msra.mxu0 0.0
        %473 = vmatprep.subr.mxu0 0.0
        %474 = vmatpush1.msra.mxu0 0.0
        %475 = vmatprep.subr.mxu0 0.0
        %476 = vmatpush1.msra.mxu0 0.0
        %477 = vmatprep.subr.mxu0 0.0
        %478 = vmatpush1.msra.mxu0 0.0
        %479 = vmatprep.subr.mxu0 0.0
        %480 = vmatpush1.msra.mxu0 0.0
        %481 = vmatprep.subr.mxu0 0.0
        %482 = vmatpush1.msra.mxu0 0.0
        %483 = vmatprep.subr.mxu0 0.0
        %484 = vmatpush1.msra.mxu0 0.0
        %485 = vmatprep.subr.mxu0 0.0
        %486 = vmatpush1.msra.mxu0 0.0
        %487 = vmatprep.mubr.f32.mxu0 0.0
        %488 = vmatmul.mubr.f32.gmra.mrb[0].mxu0 %v409
        %v489 = vpop.f32.mrb[0].mxu0
        %v490 = vadd.f32 0.0, %v489
        %v491 = vpop.f32.mrb[0].mxu0
        %492 = vmatprep.mubr.f32.mxu0 0.0
        %493 = vmatmul.mubr.f32.gmra.mrb[0].mxu0 %v412
        %v494 = vpop.f32.mrb[0].mxu0
        %v495 = vadd.f32 0.0, %v494
        %v496 = vpop.f32.mrb[0].mxu0
        %497 = vmatprep.mubr.f32.mxu0 0.0
        %498 = vmatmul.mubr.f32.gmra.mrb[0].mxu0 %v415
        %v499 = vpop.f32.mrb[0].mxu0
        %v500 = vadd.f32 0.0, %v499
        %v501 = vpop.f32.mrb[0].mxu0
        %502 = vmatprep.mubr.f32.mxu0 0.0
        %503 = vmatmul.mubr.f32.gmra.mrb[0].mxu0 %v418
        %v504 = vpop.f32.mrb[0].mxu0
        %v505 = vadd.f32 0.0, %v504
        %v506 = vpop.f32.mrb[0].mxu0
        %507 = vmatprep.mubr.f32.mxu0 0.0
        %508 = vmatmul.mubr.f32.gmra.mrb[0].mxu0 %v421
        %v509 = vpop.f32.mrb[0].mxu0
        %v510 = vadd.f32 0.0, %v509
        %v511 = vpop.f32.mrb[0].mxu0
        %512 = vdwg.mxu0
        %v513 = vld [vmem:[#allocation2] sm:$0xff]
        %v514 = vld [vmem:[#allocation2 + $0x8] sm:$0xff]
        %v515 = vld [vmem:[#allocation2 + $0x10] sm:$0xff]
        %v516 = vld [vmem:[#allocation2 + $0x18] sm:$0xff]
        %s517 = scalar_lea.vmem [#allocation2], 32
        %v518 = vld [vmem:[%s517] sm:$0xff]
        %v519 = vld [vmem:[%s517 + $0x8] sm:$0xff]
        %v520 = vld [vmem:[%s517 + $0x10] sm:$0xff]
        %v521 = vld [vmem:[%s517 + $0x18] sm:$0xff]
        %vm522 = vcmask 261120
        %v524 = vsel %vm522, %v495, 0
        %526 = vmatprep.subr.mxu0 0.0
        %527 = vmatpush1.msra.mxu0 %v518
        %528 = vmatprep.subr.mxu0 0.0
        %529 = vmatpush1.msra.mxu0 %v519
        %530 = vmatprep.subr.mxu0 0.0
        %531 = vmatpush1.msra.mxu0 %v520
        %532 = vmatprep.subr.mxu0 0.0
        %533 = vmatpush1.msra.mxu0 %v521
        %534 = vmatprep.subr.mxu0 0.0
        %535 = vmatpush1.msra.mxu0 0.0
        %536 = vmatprep.subr.mxu0 0.0
        %537 = vmatpush1.msra.mxu0 0.0
        %538 = vmatprep.subr.mxu0 0.0
        %539 = vmatpush1.msra.mxu0 0.0
        %540 = vmatprep.subr.mxu0 0.0
        %541 = vmatpush1.msra.mxu0 0.0
        %542 = vmatprep.subr.mxu0 0.0
        %543 = vmatpush1.msra.mxu0 0.0
        %544 = vmatprep.subr.mxu0 0.0
        %545 = vmatpush1.msra.mxu0 0.0
        %546 = vmatprep.subr.mxu0 0.0
        %547 = vmatpush1.msra.mxu0 0.0
        %548 = vmatprep.subr.mxu0 0.0
        %549 = vmatpush1.msra.mxu0 0.0
        %550 = vmatprep.subr.mxu0 0.0
        %551 = vmatpush1.msra.mxu0 0.0
        %552 = vmatprep.subr.mxu0 0.0
        %553 = vmatpush1.msra.mxu0 0.0
        %554 = vmatprep.subr.mxu0 0.0
        %555 = vmatpush1.msra.mxu0 0.0
        %556 = vmatprep.subr.mxu0 0.0
        %557 = vmatpush1.msra.mxu0 0.0
        %558 = vmatprep.subr.mxu0 0.0
        %559 = vmatpush1.msra.mxu0 0.0
        %560 = vmatprep.subr.mxu0 0.0
        %561 = vmatpush1.msra.mxu0 0.0
        %562 = vmatprep.subr.mxu0 0.0
        %563 = vmatpush1.msra.mxu0 0.0
        %564 = vmatprep.subr.mxu0 0.0
        %565 = vmatpush1.msra.mxu0 0.0
        %566 = vmatprep.subr.mxu0 0.0
        %567 = vmatpush1.msra.mxu0 0.0
        %568 = vmatprep.subr.mxu0 0.0
        %569 = vmatpush1.msra.mxu0 0.0
        %570 = vmatprep.subr.mxu0 0.0
        %571 = vmatpush1.msra.mxu0 0.0
        %572 = vmatprep.subr.mxu0 0.0
        %573 = vmatpush1.msra.mxu0 0.0
        %574 = vmatprep.subr.mxu0 0.0
        %575 = vmatpush1.msra.mxu0 0.0
        %576 = vmatprep.subr.mxu0 0.0
        %577 = vmatpush1.msra.mxu0 0.0
        %578 = vmatprep.subr.mxu0 0.0
        %579 = vmatpush1.msra.mxu0 0.0
        %580 = vmatprep.subr.mxu0 0.0
        %581 = vmatpush1.msra.mxu0 0.0
        %582 = vmatprep.subr.mxu0 0.0
        %583 = vmatpush1.msra.mxu0 0.0
        %584 = vmatprep.subr.mxu0 0.0
        %585 = vmatpush1.msra.mxu0 0.0
        %586 = vmatprep.subr.mxu0 0.0
        %587 = vmatpush1.msra.mxu0 0.0
        %588 = vmatprep.subr.mxu0 0.0
        %589 = vmatpush1.msra.mxu0 0.0
        %590 = vmatprep.mubr.f32.mxu0 0.0
        %591 = vmatmul.mubr.f32.gmra.mrb[0].mxu0 %v524
        %v592 = vpop.f32.mrb[0].mxu0
        %v593 = vadd.f32 0.0, %v592
        %v594 = vpop.f32.mrb[0].mxu0
        %595 = vdwg.mxu0
        %v597 = vsel %vm522, %v490, 0
        %599 = vmatprep.subr.mxu0 0.0
        %600 = vmatpush1.msra.mxu0 %v513
        %601 = vmatprep.subr.mxu0 0.0
        %602 = vmatpush1.msra.mxu0 %v514
        %603 = vmatprep.subr.mxu0 0.0
        %604 = vmatpush1.msra.mxu0 %v515
        %605 = vmatprep.subr.mxu0 0.0
        %606 = vmatpush1.msra.mxu0 %v516
        %607 = vmatprep.subr.mxu0 0.0
        %608 = vmatpush1.msra.mxu0 0.0
        %609 = vmatprep.subr.mxu0 0.0
        %610 = vmatpush1.msra.mxu0 0.0
        %611 = vmatprep.subr.mxu0 0.0
        %612 = vmatpush1.msra.mxu0 0.0
        %613 = vmatprep.subr.mxu0 0.0
        %614 = vmatpush1.msra.mxu0 0.0
        %615 = vmatprep.subr.mxu0 0.0
        %616 = vmatpush1.msra.mxu0 0.0
        %617 = vmatprep.subr.mxu0 0.0
        %618 = vmatpush1.msra.mxu0 0.0
        %619 = vmatprep.subr.mxu0 0.0
        %620 = vmatpush1.msra.mxu0 0.0
        %621 = vmatprep.subr.mxu0 0.0
        %622 = vmatpush1.msra.mxu0 0.0
        %623 = vmatprep.subr.mxu0 0.0
        %624 = vmatpush1.msra.mxu0 0.0
        %625 = vmatprep.subr.mxu0 0.0
        %626 = vmatpush1.msra.mxu0 0.0
        %627 = vmatprep.subr.mxu0 0.0
        %628 = vmatpush1.msra.mxu0 0.0
        %629 = vmatprep.subr.mxu0 0.0
        %630 = vmatpush1.msra.mxu0 0.0
        %631 = vmatprep.subr.mxu0 0.0
        %632 = vmatpush1.msra.mxu0 0.0
        %633 = vmatprep.subr.mxu0 0.0
        %634 = vmatpush1.msra.mxu0 0.0
        %635 = vmatprep.subr.mxu0 0.0
        %636 = vmatpush1.msra.mxu0 0.0
        %637 = vmatprep.subr.mxu0 0.0
        %638 = vmatpush1.msra.mxu0 0.0
        %639 = vmatprep.subr.mxu0 0.0
        %640 = vmatpush1.msra.mxu0 0.0
        %641 = vmatprep.subr.mxu0 0.0
        %642 = vmatpush1.msra.mxu0 0.0
        %643 = vmatprep.subr.mxu0 0.0
        %644 = vmatpush1.msra.mxu0 0.0
        %645 = vmatprep.subr.mxu0 0.0
        %646 = vmatpush1.msra.mxu0 0.0
        %647 = vmatprep.subr.mxu0 0.0
        %648 = vmatpush1.msra.mxu0 0.0
        %649 = vmatprep.subr.mxu0 0.0
        %650 = vmatpush1.msra.mxu0 0.0
        %651 = vmatprep.subr.mxu0 0.0
        %652 = vmatpush1.msra.mxu0 0.0
        %653 = vmatprep.subr.mxu0 0.0
        %654 = vmatpush1.msra.mxu0 0.0
        %655 = vmatprep.subr.mxu0 0.0
        %656 = vmatpush1.msra.mxu0 0.0
        %657 = vmatprep.subr.mxu0 0.0
        %658 = vmatpush1.msra.mxu0 0.0
        %659 = vmatprep.subr.mxu0 0.0
        %660 = vmatpush1.msra.mxu0 0.0
        %661 = vmatprep.subr.mxu0 0.0
        %662 = vmatpush1.msra.mxu0 0.0
        %663 = vmatprep.mubr.f32.mxu0 0.0
        %664 = vmatmul.mubr.f32.gmra.mrb[0].mxu0 %v597
        %v665 = vpop.f32.mrb[0].mxu0
        %v666 = vadd.f32 %v593, %v665
        %v667 = vpop.f32.mrb[0].mxu0
        %668 = vdwg.mxu0
        %s669 = scalar_lea.vmem [#allocation2], 64
        %v670 = vld [vmem:[%s669] sm:$0xff]
        %v671 = vld [vmem:[%s669 + $0x8] sm:$0xff]
        %v672 = vld [vmem:[%s669 + $0x10] sm:$0xff]
        %v673 = vld [vmem:[%s669 + $0x18] sm:$0xff]
        %v675 = vsel %vm522, %v500, 0
        %677 = vmatprep.subr.mxu0 0.0
        %678 = vmatpush1.msra.mxu0 %v670
        %679 = vmatprep.subr.mxu0 0.0
        %680 = vmatpush1.msra.mxu0 %v671
        %681 = vmatprep.subr.mxu0 0.0
        %682 = vmatpush1.msra.mxu0 %v672
        %683 = vmatprep.subr.mxu0 0.0
        %684 = vmatpush1.msra.mxu0 %v673
        %685 = vmatprep.subr.mxu0 0.0
        %686 = vmatpush1.msra.mxu0 0.0
        %687 = vmatprep.subr.mxu0 0.0
        %688 = vmatpush1.msra.mxu0 0.0
        %689 = vmatprep.subr.mxu0 0.0
        %690 = vmatpush1.msra.mxu0 0.0
        %691 = vmatprep.subr.mxu0 0.0
        %692 = vmatpush1.msra.mxu0 0.0
        %693 = vmatprep.subr.mxu0 0.0
        %694 = vmatpush1.msra.mxu0 0.0
        %695 = vmatprep.subr.mxu0 0.0
        %696 = vmatpush1.msra.mxu0 0.0
        %697 = vmatprep.subr.mxu0 0.0
        %698 = vmatpush1.msra.mxu0 0.0
        %699 = vmatprep.subr.mxu0 0.0
        %700 = vmatpush1.msra.mxu0 0.0
        %701 = vmatprep.subr.mxu0 0.0
        %702 = vmatpush1.msra.mxu0 0.0
        %703 = vmatprep.subr.mxu0 0.0
        %704 = vmatpush1.msra.mxu0 0.0
        %705 = vmatprep.subr.mxu0 0.0
        %706 = vmatpush1.msra.mxu0 0.0
        %707 = vmatprep.subr.mxu0 0.0
        %708 = vmatpush1.msra.mxu0 0.0
        %709 = vmatprep.subr.mxu0 0.0
        %710 = vmatpush1.msra.mxu0 0.0
        %711 = vmatprep.subr.mxu0 0.0
        %712 = vmatpush1.msra.mxu0 0.0
        %713 = vmatprep.subr.mxu0 0.0
        %714 = vmatpush1.msra.mxu0 0.0
        %715 = vmatprep.subr.mxu0 0.0
        %716 = vmatpush1.msra.mxu0 0.0
        %717 = vmatprep.subr.mxu0 0.0
        %718 = vmatpush1.msra.mxu0 0.0
        %719 = vmatprep.subr.mxu0 0.0
        %720 = vmatpush1.msra.mxu0 0.0
        %721 = vmatprep.subr.mxu0 0.0
        %722 = vmatpush1.msra.mxu0 0.0
        %723 = vmatprep.subr.mxu0 0.0
        %724 = vmatpush1.msra.mxu0 0.0
        %725 = vmatprep.subr.mxu0 0.0
        %726 = vmatpush1.msra.mxu0 0.0
        %727 = vmatprep.subr.mxu0 0.0
        %728 = vmatpush1.msra.mxu0 0.0
        %729 = vmatprep.subr.mxu0 0.0
        %730 = vmatpush1.msra.mxu0 0.0
        %731 = vmatprep.subr.mxu0 0.0
        %732 = vmatpush1.msra.mxu0 0.0
        %733 = vmatprep.subr.mxu0 0.0
        %734 = vmatpush1.msra.mxu0 0.0
        %735 = vmatprep.subr.mxu0 0.0
        %736 = vmatpush1.msra.mxu0 0.0
        %737 = vmatprep.subr.mxu0 0.0
        %738 = vmatpush1.msra.mxu0 0.0
        %739 = vmatprep.subr.mxu0 0.0
        %740 = vmatpush1.msra.mxu0 0.0
        %741 = vmatprep.mubr.f32.mxu0 0.0
        %742 = vmatmul.mubr.f32.gmra.mrb[0].mxu0 %v675
        %v743 = vpop.f32.mrb[0].mxu0
        %v744 = vadd.f32 0.0, %v743
        %v745 = vpop.f32.mrb[0].mxu0
        %746 = vdwg.mxu0
        %v747 = vadd.f32 %v666, %v744
        %s748 = scalar_lea.vmem [#allocation2], 96
        %v749 = vld [vmem:[%s748] sm:$0xff]
        %v750 = vld [vmem:[%s748 + $0x8] sm:$0xff]
        %v751 = vld [vmem:[%s748 + $0x10] sm:$0xff]
        %v752 = vld [vmem:[%s748 + $0x18] sm:$0xff]
        %v754 = vsel %vm522, %v505, 0
        %756 = vmatprep.subr.mxu0 0.0
        %757 = vmatpush1.msra.mxu0 %v749
        %758 = vmatprep.subr.mxu0 0.0
        %759 = vmatpush1.msra.mxu0 %v750
        %760 = vmatprep.subr.mxu0 0.0
        %761 = vmatpush1.msra.mxu0 %v751
        %762 = vmatprep.subr.mxu0 0.0
        %763 = vmatpush1.msra.mxu0 %v752
        %764 = vmatprep.subr.mxu0 0.0
        %765 = vmatpush1.msra.mxu0 0.0
        %766 = vmatprep.subr.mxu0 0.0
        %767 = vmatpush1.msra.mxu0 0.0
        %768 = vmatprep.subr.mxu0 0.0
        %769 = vmatpush1.msra.mxu0 0.0
        %770 = vmatprep.subr.mxu0 0.0
        %771 = vmatpush1.msra.mxu0 0.0
        %772 = vmatprep.subr.mxu0 0.0
        %773 = vmatpush1.msra.mxu0 0.0
        %774 = vmatprep.subr.mxu0 0.0
        %775 = vmatpush1.msra.mxu0 0.0
        %776 = vmatprep.subr.mxu0 0.0
        %777 = vmatpush1.msra.mxu0 0.0
        %778 = vmatprep.subr.mxu0 0.0
        %779 = vmatpush1.msra.mxu0 0.0
        %780 = vmatprep.subr.mxu0 0.0
        %781 = vmatpush1.msra.mxu0 0.0
        %782 = vmatprep.subr.mxu0 0.0
        %783 = vmatpush1.msra.mxu0 0.0
        %784 = vmatprep.subr.mxu0 0.0
        %785 = vmatpush1.msra.mxu0 0.0
        %786 = vmatprep.subr.mxu0 0.0
        %787 = vmatpush1.msra.mxu0 0.0
        %788 = vmatprep.subr.mxu0 0.0
        %789 = vmatpush1.msra.mxu0 0.0
        %790 = vmatprep.subr.mxu0 0.0
        %791 = vmatpush1.msra.mxu0 0.0
        %792 = vmatprep.subr.mxu0 0.0
        %793 = vmatpush1.msra.mxu0 0.0
        %794 = vmatprep.subr.mxu0 0.0
        %795 = vmatpush1.msra.mxu0 0.0
        %796 = vmatprep.subr.mxu0 0.0
        %797 = vmatpush1.msra.mxu0 0.0
        %798 = vmatprep.subr.mxu0 0.0
        %799 = vmatpush1.msra.mxu0 0.0
        %800 = vmatprep.subr.mxu0 0.0
        %801 = vmatpush1.msra.mxu0 0.0
        %802 = vmatprep.subr.mxu0 0.0
        %803 = vmatpush1.msra.mxu0 0.0
        %804 = vmatprep.subr.mxu0 0.0
        %805 = vmatpush1.msra.mxu0 0.0
        %806 = vmatprep.subr.mxu0 0.0
        %807 = vmatpush1.msra.mxu0 0.0
        %808 = vmatprep.subr.mxu0 0.0
        %809 = vmatpush1.msra.mxu0 0.0
        %810 = vmatprep.subr.mxu0 0.0
        %811 = vmatpush1.msra.mxu0 0.0
        %812 = vmatprep.subr.mxu0 0.0
        %813 = vmatpush1.msra.mxu0 0.0
        %814 = vmatprep.subr.mxu0 0.0
        %815 = vmatpush1.msra.mxu0 0.0
        %816 = vmatprep.subr.mxu0 0.0
        %817 = vmatpush1.msra.mxu0 0.0
        %818 = vmatprep.subr.mxu0 0.0
        %819 = vmatpush1.msra.mxu0 0.0
        %820 = vmatprep.mubr.f32.mxu0 0.0
        %821 = vmatmul.mubr.f32.gmra.mrb[0].mxu0 %v754
        %v822 = vpop.f32.mrb[0].mxu0
        %v823 = vadd.f32 0.0, %v822
        %v824 = vpop.f32.mrb[0].mxu0
        %825 = vdwg.mxu0
        %v826 = vadd.f32 %v747, %v823
        %s827 = scalar_lea.vmem [#allocation2], 128
        %v828 = vld [vmem:[%s827] sm:$0xff]
        %v829 = vld [vmem:[%s827 + $0x8] sm:$0xff]
        %v830 = vld [vmem:[%s827 + $0x10] sm:$0xff]
        %v831 = vld [vmem:[%s827 + $0x18] sm:$0xff]
        %v833 = vsel %vm522, %v510, 0
        %835 = vmatprep.subr.mxu0 0.0
        %836 = vmatpush1.msra.mxu0 %v828
        %837 = vmatprep.subr.mxu0 0.0
        %838 = vmatpush1.msra.mxu0 %v829
        %839 = vmatprep.subr.mxu0 0.0
        %840 = vmatpush1.msra.mxu0 %v830
        %841 = vmatprep.subr.mxu0 0.0
        %842 = vmatpush1.msra.mxu0 %v831
        %843 = vmatprep.subr.mxu0 0.0
        %844 = vmatpush1.msra.mxu0 0.0
        %845 = vmatprep.subr.mxu0 0.0
        %846 = vmatpush1.msra.mxu0 0.0
        %847 = vmatprep.subr.mxu0 0.0
        %848 = vmatpush1.msra.mxu0 0.0
        %849 = vmatprep.subr.mxu0 0.0
        %850 = vmatpush1.msra.mxu0 0.0
        %851 = vmatprep.subr.mxu0 0.0
        %852 = vmatpush1.msra.mxu0 0.0
        %853 = vmatprep.subr.mxu0 0.0
        %854 = vmatpush1.msra.mxu0 0.0
        %855 = vmatprep.subr.mxu0 0.0
        %856 = vmatpush1.msra.mxu0 0.0
        %857 = vmatprep.subr.mxu0 0.0
        %858 = vmatpush1.msra.mxu0 0.0
        %859 = vmatprep.subr.mxu0 0.0
        %860 = vmatpush1.msra.mxu0 0.0
        %861 = vmatprep.subr.mxu0 0.0
        %862 = vmatpush1.msra.mxu0 0.0
        %863 = vmatprep.subr.mxu0 0.0
        %864 = vmatpush1.msra.mxu0 0.0
        %865 = vmatprep.subr.mxu0 0.0
        %866 = vmatpush1.msra.mxu0 0.0
        %867 = vmatprep.subr.mxu0 0.0
        %868 = vmatpush1.msra.mxu0 0.0
        %869 = vmatprep.subr.mxu0 0.0
        %870 = vmatpush1.msra.mxu0 0.0
        %871 = vmatprep.subr.mxu0 0.0
        %872 = vmatpush1.msra.mxu0 0.0
        %873 = vmatprep.subr.mxu0 0.0
        %874 = vmatpush1.msra.mxu0 0.0
        %875 = vmatprep.subr.mxu0 0.0
        %876 = vmatpush1.msra.mxu0 0.0
        %877 = vmatprep.subr.mxu0 0.0
        %878 = vmatpush1.msra.mxu0 0.0
        %879 = vmatprep.subr.mxu0 0.0
        %880 = vmatpush1.msra.mxu0 0.0
        %881 = vmatprep.subr.mxu0 0.0
        %882 = vmatpush1.msra.mxu0 0.0
        %883 = vmatprep.subr.mxu0 0.0
        %884 = vmatpush1.msra.mxu0 0.0
        %885 = vmatprep.subr.mxu0 0.0
        %886 = vmatpush1.msra.mxu0 0.0
        %887 = vmatprep.subr.mxu0 0.0
        %888 = vmatpush1.msra.mxu0 0.0
        %889 = vmatprep.subr.mxu0 0.0
        %890 = vmatpush1.msra.mxu0 0.0
        %891 = vmatprep.subr.mxu0 0.0
        %892 = vmatpush1.msra.mxu0 0.0
        %893 = vmatprep.subr.mxu0 0.0
        %894 = vmatpush1.msra.mxu0 0.0
        %895 = vmatprep.subr.mxu0 0.0
        %896 = vmatpush1.msra.mxu0 0.0
        %897 = vmatprep.subr.mxu0 0.0
        %898 = vmatpush1.msra.mxu0 0.0
        %899 = vmatprep.mubr.f32.mxu0 0.0
        %900 = vmatmul.mubr.f32.gmra.mrb[0].mxu0 %v833
        %v901 = vpop.f32.mrb[0].mxu0
        %v902 = vadd.f32 0.0, %v901
        %v903 = vpop.f32.mrb[0].mxu0
        %904 = vdwg.mxu0
        %v905 = vadd.f32 %v826, %v902
        %v906 = vld [vmem:[%s4] sm:$0x1]
        %v908 = vlaneseq
        %v909 = vshrl.u32 %v908, 7
        %v910 = vsub.s32 0, %v909
        %v911 = vrot.slane %v906, %v910
        %v913 = vadd.f32 %v905, %v911
        %v914 = vmax.f32 %v913, 0.0
        %915 = vmatprep.subr.mxu0 0.0
        %916 = vmatpush1.msra.mxu0 %v914
        %917 = vmatprep.subr.mxu0 0.0
        %918 = vmatpush1.msra.mxu0 0.0
        %919 = vmatprep.subr.mxu0 0.0
        %920 = vmatpush1.msra.mxu0 0.0
        %921 = vmatprep.subr.mxu0 0.0
        %922 = vmatpush1.msra.mxu0 0.0
        %923 = vmatprep.subr.mxu0 0.0
        %924 = vmatpush1.msra.mxu0 0.0
        %925 = vmatprep.subr.mxu0 0.0
        %926 = vmatpush1.msra.mxu0 0.0
        %927 = vmatprep.subr.mxu0 0.0
        %928 = vmatpush1.msra.mxu0 0.0
        %929 = vmatprep.subr.mxu0 0.0
        %930 = vmatpush1.msra.mxu0 0.0
        %931 = vmatprep.subr.mxu0 0.0
        %932 = vmatpush1.msra.mxu0 0.0
        %933 = vmatprep.subr.mxu0 0.0
        %934 = vmatpush1.msra.mxu0 0.0
        %935 = vmatprep.subr.mxu0 0.0
        %936 = vmatpush1.msra.mxu0 0.0
        %937 = vmatprep.subr.mxu0 0.0
        %938 = vmatpush1.msra.mxu0 0.0
        %939 = vmatprep.subr.mxu0 0.0
        %940 = vmatpush1.msra.mxu0 0.0
        %941 = vmatprep.subr.mxu0 0.0
        %942 = vmatpush1.msra.mxu0 0.0
        %943 = vmatprep.subr.mxu0 0.0
        %944 = vmatpush1.msra.mxu0 0.0
        %945 = vmatprep.subr.mxu0 0.0
        %946 = vmatpush1.msra.mxu0 0.0
        %947 = vmatprep.subr.mxu0 0.0
        %948 = vmatpush1.msra.mxu0 0.0
        %949 = vmatprep.subr.mxu0 0.0
        %950 = vmatpush1.msra.mxu0 0.0
        %951 = vmatprep.subr.mxu0 0.0
        %952 = vmatpush1.msra.mxu0 0.0
        %953 = vmatprep.subr.mxu0 0.0
        %954 = vmatpush1.msra.mxu0 0.0
        %955 = vmatprep.subr.mxu0 0.0
        %956 = vmatpush1.msra.mxu0 0.0
        %957 = vmatprep.subr.mxu0 0.0
        %958 = vmatpush1.msra.mxu0 0.0
        %959 = vmatprep.subr.mxu0 0.0
        %960 = vmatpush1.msra.mxu0 0.0
        %961 = vmatprep.subr.mxu0 0.0
        %962 = vmatpush1.msra.mxu0 0.0
        %963 = vmatprep.subr.mxu0 0.0
        %964 = vmatpush1.msra.mxu0 0.0
        %965 = vmatprep.subr.mxu0 0.0
        %966 = vmatpush1.msra.mxu0 0.0
        %967 = vmatprep.subr.mxu0 0.0
        %968 = vmatpush1.msra.mxu0 0.0
        %969 = vmatprep.subr.mxu0 0.0
        %970 = vmatpush1.msra.mxu0 0.0
        %971 = vmatprep.subr.mxu0 0.0
        %972 = vmatpush1.msra.mxu0 0.0
        %973 = vmatprep.subr.mxu0 0.0
        %974 = vmatpush1.msra.mxu0 0.0
        %975 = vmatprep.subr.mxu0 0.0
        %976 = vmatpush1.msra.mxu0 0.0
        %977 = vmatprep.subr.mxu0 0.0
        %978 = vmatpush1.msra.mxu0 0.0
        %979 = vmatprep.mubr.f32.mxu0 0.0
        %980 = vmatmul.mubr.f32.gmra.mrb[0].mxu0 %v409
        %v981 = vpop.f32.mrb[0].mxu0
        %v982 = vadd.f32 0.0, %v981
        %v983 = vpop.f32.mrb[0].mxu0
        %984 = vmatprep.mubr.f32.mxu0 0.0
        %985 = vmatmul.mubr.f32.gmra.mrb[0].mxu0 %v412
        %v986 = vpop.f32.mrb[0].mxu0
        %v987 = vadd.f32 0.0, %v986
        %v988 = vpop.f32.mrb[0].mxu0
        %989 = vmatprep.mubr.f32.mxu0 0.0
        %990 = vmatmul.mubr.f32.gmra.mrb[0].mxu0 %v415
        %v991 = vpop.f32.mrb[0].mxu0
        %v992 = vadd.f32 0.0, %v991
        %v993 = vpop.f32.mrb[0].mxu0
        %994 = vmatprep.mubr.f32.mxu0 0.0
        %995 = vmatmul.mubr.f32.gmra.mrb[0].mxu0 %v418
        %v996 = vpop.f32.mrb[0].mxu0
        %v997 = vadd.f32 0.0, %v996
        %v998 = vpop.f32.mrb[0].mxu0
        %999 = vmatprep.mubr.f32.mxu0 0.0
        %1000 = vmatmul.mubr.f32.gmra.mrb[0].mxu0 %v421
        %v1001 = vpop.f32.mrb[0].mxu0
        %v1002 = vadd.f32 0.0, %v1001
        %v1003 = vpop.f32.mrb[0].mxu0
        %1004 = vdwg.mxu0
        %v1005 = vld [vmem:[#allocation5] sm:$0xff]
        %v1006 = vld [vmem:[#allocation5 + $0x8] sm:$0xff]
        %v1007 = vld [vmem:[#allocation5 + $0x10] sm:$0xff]
        %v1008 = vld [vmem:[#allocation5 + $0x18] sm:$0xff]
        %s1009 = scalar_lea.vmem [#allocation5], 32
        %v1010 = vld [vmem:[%s1009] sm:$0xff]
        %v1011 = vld [vmem:[%s1009 + $0x8] sm:$0xff]
        %v1012 = vld [vmem:[%s1009 + $0x10] sm:$0xff]
        %v1013 = vld [vmem:[%s1009 + $0x18] sm:$0xff]
        %v1015 = vsel %vm522, %v987, 0
        %1017 = vmatprep.subr.mxu0 0.0
        %1018 = vmatpush1.msra.mxu0 %v1010
        %1019 = vmatprep.subr.mxu0 0.0
        %1020 = vmatpush1.msra.mxu0 %v1011
        %1021 = vmatprep.subr.mxu0 0.0
        %1022 = vmatpush1.msra.mxu0 %v1012
        %1023 = vmatprep.subr.mxu0 0.0
        %1024 = vmatpush1.msra.mxu0 %v1013
        %1025 = vmatprep.subr.mxu0 0.0
        %1026 = vmatpush1.msra.mxu0 0.0
        %1027 = vmatprep.subr.mxu0 0.0
        %1028 = vmatpush1.msra.mxu0 0.0
        %1029 = vmatprep.subr.mxu0 0.0
        %1030 = vmatpush1.msra.mxu0 0.0
        %1031 = vmatprep.subr.mxu0 0.0
        %1032 = vmatpush1.msra.mxu0 0.0
        %1033 = vmatprep.subr.mxu0 0.0
        %1034 = vmatpush1.msra.mxu0 0.0
        %1035 = vmatprep.subr.mxu0 0.0
        %1036 = vmatpush1.msra.mxu0 0.0
        %1037 = vmatprep.subr.mxu0 0.0
        %1038 = vmatpush1.msra.mxu0 0.0
        %1039 = vmatprep.subr.mxu0 0.0
        %1040 = vmatpush1.msra.mxu0 0.0
        %1041 = vmatprep.subr.mxu0 0.0
        %1042 = vmatpush1.msra.mxu0 0.0
        %1043 = vmatprep.subr.mxu0 0.0
        %1044 = vmatpush1.msra.mxu0 0.0
        %1045 = vmatprep.subr.mxu0 0.0
        %1046 = vmatpush1.msra.mxu0 0.0
        %1047 = vmatprep.subr.mxu0 0.0
        %1048 = vmatpush1.msra.mxu0 0.0
        %1049 = vmatprep.subr.mxu0 0.0
        %1050 = vmatpush1.msra.mxu0 0.0
        %1051 = vmatprep.subr.mxu0 0.0
        %1052 = vmatpush1.msra.mxu0 0.0
        %1053 = vmatprep.subr.mxu0 0.0
        %1054 = vmatpush1.msra.mxu0 0.0
        %1055 = vmatprep.subr.mxu0 0.0
        %1056 = vmatpush1.msra.mxu0 0.0
        %1057 = vmatprep.subr.mxu0 0.0
        %1058 = vmatpush1.msra.mxu0 0.0
        %1059 = vmatprep.subr.mxu0 0.0
        %1060 = vmatpush1.msra.mxu0 0.0
        %1061 = vmatprep.subr.mxu0 0.0
        %1062 = vmatpush1.msra.mxu0 0.0
        %1063 = vmatprep.subr.mxu0 0.0
        %1064 = vmatpush1.msra.mxu0 0.0
        %1065 = vmatprep.subr.mxu0 0.0
        %1066 = vmatpush1.msra.mxu0 0.0
        %1067 = vmatprep.subr.mxu0 0.0
        %1068 = vmatpush1.msra.mxu0 0.0
        %1069 = vmatprep.subr.mxu0 0.0
        %1070 = vmatpush1.msra.mxu0 0.0
        %1071 = vmatprep.subr.mxu0 0.0
        %1072 = vmatpush1.msra.mxu0 0.0
        %1073 = vmatprep.subr.mxu0 0.0
        %1074 = vmatpush1.msra.mxu0 0.0
        %1075 = vmatprep.subr.mxu0 0.0
        %1076 = vmatpush1.msra.mxu0 0.0
        %1077 = vmatprep.subr.mxu0 0.0
        %1078 = vmatpush1.msra.mxu0 0.0
        %1079 = vmatprep.subr.mxu0 0.0
        %1080 = vmatpush1.msra.mxu0 0.0
        %1081 = vmatprep.mubr.f32.mxu0 0.0
        %1082 = vmatmul.mubr.f32.gmra.mrb[0].mxu0 %v1015
        %v1083 = vpop.f32.mrb[0].mxu0
        %v1084 = vadd.f32 0.0, %v1083
        %v1085 = vpop.f32.mrb[0].mxu0
        %1086 = vdwg.mxu0
        %v1088 = vsel %vm522, %v982, 0
        %1090 = vmatprep.subr.mxu0 0.0
        %1091 = vmatpush1.msra.mxu0 %v1005
        %1092 = vmatprep.subr.mxu0 0.0
        %1093 = vmatpush1.msra.mxu0 %v1006
        %1094 = vmatprep.subr.mxu0 0.0
        %1095 = vmatpush1.msra.mxu0 %v1007
        %1096 = vmatprep.subr.mxu0 0.0
        %1097 = vmatpush1.msra.mxu0 %v1008
        %1098 = vmatprep.subr.mxu0 0.0
        %1099 = vmatpush1.msra.mxu0 0.0
        %1100 = vmatprep.subr.mxu0 0.0
        %1101 = vmatpush1.msra.mxu0 0.0
        %1102 = vmatprep.subr.mxu0 0.0
        %1103 = vmatpush1.msra.mxu0 0.0
        %1104 = vmatprep.subr.mxu0 0.0
        %1105 = vmatpush1.msra.mxu0 0.0
        %1106 = vmatprep.subr.mxu0 0.0
        %1107 = vmatpush1.msra.mxu0 0.0
        %1108 = vmatprep.subr.mxu0 0.0
        %1109 = vmatpush1.msra.mxu0 0.0
        %1110 = vmatprep.subr.mxu0 0.0
        %1111 = vmatpush1.msra.mxu0 0.0
        %1112 = vmatprep.subr.mxu0 0.0
        %1113 = vmatpush1.msra.mxu0 0.0
        %1114 = vmatprep.subr.mxu0 0.0
        %1115 = vmatpush1.msra.mxu0 0.0
        %1116 = vmatprep.subr.mxu0 0.0
        %1117 = vmatpush1.msra.mxu0 0.0
        %1118 = vmatprep.subr.mxu0 0.0
        %1119 = vmatpush1.msra.mxu0 0.0
        %1120 = vmatprep.subr.mxu0 0.0
        %1121 = vmatpush1.msra.mxu0 0.0
        %1122 = vmatprep.subr.mxu0 0.0
        %1123 = vmatpush1.msra.mxu0 0.0
        %1124 = vmatprep.subr.mxu0 0.0
        %1125 = vmatpush1.msra.mxu0 0.0
        %1126 = vmatprep.subr.mxu0 0.0
        %1127 = vmatpush1.msra.mxu0 0.0
        %1128 = vmatprep.subr.mxu0 0.0
        %1129 = vmatpush1.msra.mxu0 0.0
        %1130 = vmatprep.subr.mxu0 0.0
        %1131 = vmatpush1.msra.mxu0 0.0
        %1132 = vmatprep.subr.mxu0 0.0
        %1133 = vmatpush1.msra.mxu0 0.0
        %1134 = vmatprep.subr.mxu0 0.0
        %1135 = vmatpush1.msra.mxu0 0.0
        %1136 = vmatprep.subr.mxu0 0.0
        %1137 = vmatpush1.msra.mxu0 0.0
        %1138 = vmatprep.subr.mxu0 0.0
        %1139 = vmatpush1.msra.mxu0 0.0
        %1140 = vmatprep.subr.mxu0 0.0
        %1141 = vmatpush1.msra.mxu0 0.0
        %1142 = vmatprep.subr.mxu0 0.0
        %1143 = vmatpush1.msra.mxu0 0.0
        %1144 = vmatprep.subr.mxu0 0.0
        %1145 = vmatpush1.msra.mxu0 0.0
        %1146 = vmatprep.subr.mxu0 0.0
        %1147 = vmatpush1.msra.mxu0 0.0
        %1148 = vmatprep.subr.mxu0 0.0
        %1149 = vmatpush1.msra.mxu0 0.0
        %1150 = vmatprep.subr.mxu0 0.0
        %1151 = vmatpush1.msra.mxu0 0.0
        %1152 = vmatprep.subr.mxu0 0.0
        %1153 = vmatpush1.msra.mxu0 0.0
        %1154 = vmatprep.mubr.f32.mxu0 0.0
        %1155 = vmatmul.mubr.f32.gmra.mrb[0].mxu0 %v1088
        %v1156 = vpop.f32.mrb[0].mxu0
        %v1157 = vadd.f32 %v1084, %v1156
        %v1158 = vpop.f32.mrb[0].mxu0
        %1159 = vdwg.mxu0
        %s1160 = scalar_lea.vmem [#allocation5], 64
        %v1161 = vld [vmem:[%s1160] sm:$0xff]
        %v1162 = vld [vmem:[%s1160 + $0x8] sm:$0xff]
        %v1163 = vld [vmem:[%s1160 + $0x10] sm:$0xff]
        %v1164 = vld [vmem:[%s1160 + $0x18] sm:$0xff]
        %v1166 = vsel %vm522, %v992, 0
        %1168 = vmatprep.subr.mxu0 0.0
        %1169 = vmatpush1.msra.mxu0 %v1161
        %1170 = vmatprep.subr.mxu0 0.0
        %1171 = vmatpush1.msra.mxu0 %v1162
        %1172 = vmatprep.subr.mxu0 0.0
        %1173 = vmatpush1.msra.mxu0 %v1163
        %1174 = vmatprep.subr.mxu0 0.0
        %1175 = vmatpush1.msra.mxu0 %v1164
        %1176 = vmatprep.subr.mxu0 0.0
        %1177 = vmatpush1.msra.mxu0 0.0
        %1178 = vmatprep.subr.mxu0 0.0
        %1179 = vmatpush1.msra.mxu0 0.0
        %1180 = vmatprep.subr.mxu0 0.0
        %1181 = vmatpush1.msra.mxu0 0.0
        %1182 = vmatprep.subr.mxu0 0.0
        %1183 = vmatpush1.msra.mxu0 0.0
        %1184 = vmatprep.subr.mxu0 0.0
        %1185 = vmatpush1.msra.mxu0 0.0
        %1186 = vmatprep.subr.mxu0 0.0
        %1187 = vmatpush1.msra.mxu0 0.0
        %1188 = vmatprep.subr.mxu0 0.0
        %1189 = vmatpush1.msra.mxu0 0.0
        %1190 = vmatprep.subr.mxu0 0.0
        %1191 = vmatpush1.msra.mxu0 0.0
        %1192 = vmatprep.subr.mxu0 0.0
        %1193 = vmatpush1.msra.mxu0 0.0
        %1194 = vmatprep.subr.mxu0 0.0
        %1195 = vmatpush1.msra.mxu0 0.0
        %1196 = vmatprep.subr.mxu0 0.0
        %1197 = vmatpush1.msra.mxu0 0.0
        %1198 = vmatprep.subr.mxu0 0.0
        %1199 = vmatpush1.msra.mxu0 0.0
        %1200 = vmatprep.subr.mxu0 0.0
        %1201 = vmatpush1.msra.mxu0 0.0
        %1202 = vmatprep.subr.mxu0 0.0
        %1203 = vmatpush1.msra.mxu0 0.0
        %1204 = vmatprep.subr.mxu0 0.0
        %1205 = vmatpush1.msra.mxu0 0.0
        %1206 = vmatprep.subr.mxu0 0.0
        %1207 = vmatpush1.msra.mxu0 0.0
        %1208 = vmatprep.subr.mxu0 0.0
        %1209 = vmatpush1.msra.mxu0 0.0
        %1210 = vmatprep.subr.mxu0 0.0
        %1211 = vmatpush1.msra.mxu0 0.0
        %1212 = vmatprep.subr.mxu0 0.0
        %1213 = vmatpush1.msra.mxu0 0.0
        %1214 = vmatprep.subr.mxu0 0.0
        %1215 = vmatpush1.msra.mxu0 0.0
        %1216 = vmatprep.subr.mxu0 0.0
        %1217 = vmatpush1.msra.mxu0 0.0
        %1218 = vmatprep.subr.mxu0 0.0
        %1219 = vmatpush1.msra.mxu0 0.0
        %1220 = vmatprep.subr.mxu0 0.0
        %1221 = vmatpush1.msra.mxu0 0.0
        %1222 = vmatprep.subr.mxu0 0.0
        %1223 = vmatpush1.msra.mxu0 0.0
        %1224 = vmatprep.subr.mxu0 0.0
        %1225 = vmatpush1.msra.mxu0 0.0
        %1226 = vmatprep.subr.mxu0 0.0
        %1227 = vmatpush1.msra.mxu0 0.0
        %1228 = vmatprep.subr.mxu0 0.0
        %1229 = vmatpush1.msra.mxu0 0.0
        %1230 = vmatprep.subr.mxu0 0.0
        %1231 = vmatpush1.msra.mxu0 0.0
        %1232 = vmatprep.mubr.f32.mxu0 0.0
        %1233 = vmatmul.mubr.f32.gmra.mrb[0].mxu0 %v1166
        %v1234 = vpop.f32.mrb[0].mxu0
        %v1235 = vadd.f32 0.0, %v1234
        %v1236 = vpop.f32.mrb[0].mxu0
        %1237 = vdwg.mxu0
        %v1238 = vadd.f32 %v1157, %v1235
        %s1239 = scalar_lea.vmem [#allocation5], 96
        %v1240 = vld [vmem:[%s1239] sm:$0xff]
        %v1241 = vld [vmem:[%s1239 + $0x8] sm:$0xff]
        %v1242 = vld [vmem:[%s1239 + $0x10] sm:$0xff]
        %v1243 = vld [vmem:[%s1239 + $0x18] sm:$0xff]
        %v1245 = vsel %vm522, %v997, 0
        %1247 = vmatprep.subr.mxu0 0.0
        %1248 = vmatpush1.msra.mxu0 %v1240
        %1249 = vmatprep.subr.mxu0 0.0
        %1250 = vmatpush1.msra.mxu0 %v1241
        %1251 = vmatprep.subr.mxu0 0.0
        %1252 = vmatpush1.msra.mxu0 %v1242
        %1253 = vmatprep.subr.mxu0 0.0
        %1254 = vmatpush1.msra.mxu0 %v1243
        %1255 = vmatprep.subr.mxu0 0.0
        %1256 = vmatpush1.msra.mxu0 0.0
        %1257 = vmatprep.subr.mxu0 0.0
        %1258 = vmatpush1.msra.mxu0 0.0
        %1259 = vmatprep.subr.mxu0 0.0
        %1260 = vmatpush1.msra.mxu0 0.0
        %1261 = vmatprep.subr.mxu0 0.0
        %1262 = vmatpush1.msra.mxu0 0.0
        %1263 = vmatprep.subr.mxu0 0.0
        %1264 = vmatpush1.msra.mxu0 0.0
        %1265 = vmatprep.subr.mxu0 0.0
        %1266 = vmatpush1.msra.mxu0 0.0
        %1267 = vmatprep.subr.mxu0 0.0
        %1268 = vmatpush1.msra.mxu0 0.0
        %1269 = vmatprep.subr.mxu0 0.0
        %1270 = vmatpush1.msra.mxu0 0.0
        %1271 = vmatprep.subr.mxu0 0.0
        %1272 = vmatpush1.msra.mxu0 0.0
        %1273 = vmatprep.subr.mxu0 0.0
        %1274 = vmatpush1.msra.mxu0 0.0
        %1275 = vmatprep.subr.mxu0 0.0
        %1276 = vmatpush1.msra.mxu0 0.0
        %1277 = vmatprep.subr.mxu0 0.0
        %1278 = vmatpush1.msra.mxu0 0.0
        %1279 = vmatprep.subr.mxu0 0.0
        %1280 = vmatpush1.msra.mxu0 0.0
        %1281 = vmatprep.subr.mxu0 0.0
        %1282 = vmatpush1.msra.mxu0 0.0
        %1283 = vmatprep.subr.mxu0 0.0
        %1284 = vmatpush1.msra.mxu0 0.0
        %1285 = vmatprep.subr.mxu0 0.0
        %1286 = vmatpush1.msra.mxu0 0.0
        %1287 = vmatprep.subr.mxu0 0.0
        %1288 = vmatpush1.msra.mxu0 0.0
        %1289 = vmatprep.subr.mxu0 0.0
        %1290 = vmatpush1.msra.mxu0 0.0
        %1291 = vmatprep.subr.mxu0 0.0
        %1292 = vmatpush1.msra.mxu0 0.0
        %1293 = vmatprep.subr.mxu0 0.0
        %1294 = vmatpush1.msra.mxu0 0.0
        %1295 = vmatprep.subr.mxu0 0.0
        %1296 = vmatpush1.msra.mxu0 0.0
        %1297 = vmatprep.subr.mxu0 0.0
        %1298 = vmatpush1.msra.mxu0 0.0
        %1299 = vmatprep.subr.mxu0 0.0
        %1300 = vmatpush1.msra.mxu0 0.0
        %1301 = vmatprep.subr.mxu0 0.0
        %1302 = vmatpush1.msra.mxu0 0.0
        %1303 = vmatprep.subr.mxu0 0.0
        %1304 = vmatpush1.msra.mxu0 0.0
        %1305 = vmatprep.subr.mxu0 0.0
        %1306 = vmatpush1.msra.mxu0 0.0
        %1307 = vmatprep.subr.mxu0 0.0
        %1308 = vmatpush1.msra.mxu0 0.0
        %1309 = vmatprep.subr.mxu0 0.0
        %1310 = vmatpush1.msra.mxu0 0.0
        %1311 = vmatprep.mubr.f32.mxu0 0.0
        %1312 = vmatmul.mubr.f32.gmra.mrb[0].mxu0 %v1245
        %v1313 = vpop.f32.mrb[0].mxu0
        %v1314 = vadd.f32 0.0, %v1313
        %v1315 = vpop.f32.mrb[0].mxu0
        %1316 = vdwg.mxu0
        %v1317 = vadd.f32 %v1238, %v1314
        %s1318 = scalar_lea.vmem [#allocation5], 128
        %v1319 = vld [vmem:[%s1318] sm:$0xff]
        %v1320 = vld [vmem:[%s1318 + $0x8] sm:$0xff]
        %v1321 = vld [vmem:[%s1318 + $0x10] sm:$0xff]
        %v1322 = vld [vmem:[%s1318 + $0x18] sm:$0xff]
        %v1324 = vsel %vm522, %v1002, 0
        %1326 = vmatprep.subr.mxu0 0.0
        %1327 = vmatpush1.msra.mxu0 %v1319
        %1328 = vmatprep.subr.mxu0 0.0
        %1329 = vmatpush1.msra.mxu0 %v1320
        %1330 = vmatprep.subr.mxu0 0.0
        %1331 = vmatpush1.msra.mxu0 %v1321
        %1332 = vmatprep.subr.mxu0 0.0
        %1333 = vmatpush1.msra.mxu0 %v1322
        %1334 = vmatprep.subr.mxu0 0.0
        %1335 = vmatpush1.msra.mxu0 0.0
        %1336 = vmatprep.subr.mxu0 0.0
        %1337 = vmatpush1.msra.mxu0 0.0
        %1338 = vmatprep.subr.mxu0 0.0
        %1339 = vmatpush1.msra.mxu0 0.0
        %1340 = vmatprep.subr.mxu0 0.0
        %1341 = vmatpush1.msra.mxu0 0.0
        %1342 = vmatprep.subr.mxu0 0.0
        %1343 = vmatpush1.msra.mxu0 0.0
        %1344 = vmatprep.subr.mxu0 0.0
        %1345 = vmatpush1.msra.mxu0 0.0
        %1346 = vmatprep.subr.mxu0 0.0
        %1347 = vmatpush1.msra.mxu0 0.0
        %1348 = vmatprep.subr.mxu0 0.0
        %1349 = vmatpush1.msra.mxu0 0.0
        %1350 = vmatprep.subr.mxu0 0.0
        %1351 = vmatpush1.msra.mxu0 0.0
        %1352 = vmatprep.subr.mxu0 0.0
        %1353 = vmatpush1.msra.mxu0 0.0
        %1354 = vmatprep.subr.mxu0 0.0
        %1355 = vmatpush1.msra.mxu0 0.0
        %1356 = vmatprep.subr.mxu0 0.0
        %1357 = vmatpush1.msra.mxu0 0.0
        %1358 = vmatprep.subr.mxu0 0.0
        %1359 = vmatpush1.msra.mxu0 0.0
        %1360 = vmatprep.subr.mxu0 0.0
        %1361 = vmatpush1.msra.mxu0 0.0
        %1362 = vmatprep.subr.mxu0 0.0
        %1363 = vmatpush1.msra.mxu0 0.0
        %1364 = vmatprep.subr.mxu0 0.0
        %1365 = vmatpush1.msra.mxu0 0.0
        %1366 = vmatprep.subr.mxu0 0.0
        %1367 = vmatpush1.msra.mxu0 0.0
        %1368 = vmatprep.subr.mxu0 0.0
        %1369 = vmatpush1.msra.mxu0 0.0
        %1370 = vmatprep.subr.mxu0 0.0
        %1371 = vmatpush1.msra.mxu0 0.0
        %1372 = vmatprep.subr.mxu0 0.0
        %1373 = vmatpush1.msra.mxu0 0.0
        %1374 = vmatprep.subr.mxu0 0.0
        %1375 = vmatpush1.msra.mxu0 0.0
        %1376 = vmatprep.subr.mxu0 0.0
        %1377 = vmatpush1.msra.mxu0 0.0
        %1378 = vmatprep.subr.mxu0 0.0
        %1379 = vmatpush1.msra.mxu0 0.0
        %1380 = vmatprep.subr.mxu0 0.0
        %1381 = vmatpush1.msra.mxu0 0.0
        %1382 = vmatprep.subr.mxu0 0.0
        %1383 = vmatpush1.msra.mxu0 0.0
        %1384 = vmatprep.subr.mxu0 0.0
        %1385 = vmatpush1.msra.mxu0 0.0
        %1386 = vmatprep.subr.mxu0 0.0
        %1387 = vmatpush1.msra.mxu0 0.0
        %1388 = vmatprep.subr.mxu0 0.0
        %1389 = vmatpush1.msra.mxu0 0.0
        %1390 = vmatprep.mubr.f32.mxu0 0.0
        %1391 = vmatmul.mubr.f32.gmra.mrb[0].mxu0 %v1324
        %v1392 = vpop.f32.mrb[0].mxu0
        %v1393 = vadd.f32 0.0, %v1392
        %v1394 = vpop.f32.mrb[0].mxu0
        %1395 = vdwg.mxu0
        %v1396 = vadd.f32 %v1317, %v1393
        %v1397 = vld [vmem:[%s6] sm:$0x1]
        %v1399 = vlaneseq
        %v1400 = vshrl.u32 %v1399, 7
        %v1401 = vsub.s32 0, %v1400
        %v1402 = vrot.slane %v1397, %v1401
        %v1404 = vadd.f32 %v1396, %v1402
        %v1405 = vmax.f32 %v1404, 0.0
        %v1406 = vld [vmem:[%s7] sm:$0xff]
        %v1407 = vld [vmem:[%s7 + $0x8] sm:$0xff]
        %v1408 = vld [vmem:[%s7 + $0x10] sm:$0xff]
        %v1409 = vld [vmem:[%s7 + $0x18] sm:$0xff]
        %v1410 = vld [vmem:[%s8] sm:$0x1]
        %v1412 = vlaneseq
        %v1413 = vshrl.u32 %v1412, 7
        %v1414 = vsub.s32 0, %v1413
        %v1415 = vrot.slane %v1410, %v1414
        %v1418 = vsel %vm522, %v1405, 0
        %1420 = vmatprep.subr.mxu0 0.0
        %1421 = vmatpush1.msra.mxu0 %v1406
        %1422 = vmatprep.subr.mxu0 0.0
        %1423 = vmatpush1.msra.mxu0 %v1407
        %1424 = vmatprep.subr.mxu0 0.0
        %1425 = vmatpush1.msra.mxu0 %v1408
        %1426 = vmatprep.subr.mxu0 0.0
        %1427 = vmatpush1.msra.mxu0 %v1409
        %1428 = vmatprep.subr.mxu0 0.0
        %1429 = vmatpush1.msra.mxu0 0.0
        %1430 = vmatprep.subr.mxu0 0.0
        %1431 = vmatpush1.msra.mxu0 0.0
        %1432 = vmatprep.subr.mxu0 0.0
        %1433 = vmatpush1.msra.mxu0 0.0
        %1434 = vmatprep.subr.mxu0 0.0
        %1435 = vmatpush1.msra.mxu0 0.0
        %1436 = vmatprep.subr.mxu0 0.0
        %1437 = vmatpush1.msra.mxu0 0.0
        %1438 = vmatprep.subr.mxu0 0.0
        %1439 = vmatpush1.msra.mxu0 0.0
        %1440 = vmatprep.subr.mxu0 0.0
        %1441 = vmatpush1.msra.mxu0 0.0
        %1442 = vmatprep.subr.mxu0 0.0
        %1443 = vmatpush1.msra.mxu0 0.0
        %1444 = vmatprep.subr.mxu0 0.0
        %1445 = vmatpush1.msra.mxu0 0.0
        %1446 = vmatprep.subr.mxu0 0.0
        %1447 = vmatpush1.msra.mxu0 0.0
        %1448 = vmatprep.subr.mxu0 0.0
        %1449 = vmatpush1.msra.mxu0 0.0
        %1450 = vmatprep.subr.mxu0 0.0
        %1451 = vmatpush1.msra.mxu0 0.0
        %1452 = vmatprep.subr.mxu0 0.0
        %1453 = vmatpush1.msra.mxu0 0.0
        %1454 = vmatprep.subr.mxu0 0.0
        %1455 = vmatpush1.msra.mxu0 0.0
        %1456 = vmatprep.subr.mxu0 0.0
        %1457 = vmatpush1.msra.mxu0 0.0
        %1458 = vmatprep.subr.mxu0 0.0
        %1459 = vmatpush1.msra.mxu0 0.0
        %1460 = vmatprep.subr.mxu0 0.0
        %1461 = vmatpush1.msra.mxu0 0.0
        %1462 = vmatprep.subr.mxu0 0.0
        %1463 = vmatpush1.msra.mxu0 0.0
        %1464 = vmatprep.subr.mxu0 0.0
        %1465 = vmatpush1.msra.mxu0 0.0
        %1466 = vmatprep.subr.mxu0 0.0
        %1467 = vmatpush1.msra.mxu0 0.0
        %1468 = vmatprep.subr.mxu0 0.0
        %1469 = vmatpush1.msra.mxu0 0.0
        %1470 = vmatprep.subr.mxu0 0.0
        %1471 = vmatpush1.msra.mxu0 0.0
        %1472 = vmatprep.subr.mxu0 0.0
        %1473 = vmatpush1.msra.mxu0 0.0
        %1474 = vmatprep.subr.mxu0 0.0
        %1475 = vmatpush1.msra.mxu0 0.0
        %1476 = vmatprep.subr.mxu0 0.0
        %1477 = vmatpush1.msra.mxu0 0.0
        %1478 = vmatprep.subr.mxu0 0.0
        %1479 = vmatpush1.msra.mxu0 0.0
        %1480 = vmatprep.subr.mxu0 0.0
        %1481 = vmatpush1.msra.mxu0 0.0
        %1482 = vmatprep.subr.mxu0 0.0
        %1483 = vmatpush1.msra.mxu0 0.0
        %1484 = vmatprep.mubr.f32.mxu0 0.0
        %1485 = vmatmul.mubr.f32.gmra.mrb[0].mxu0 %v1418
        %v1486 = vpop.f32.mrb[0].mxu0
        %v1487 = vadd.f32 %v1415, %v1486
        %v1488 = vpop.f32.mrb[0].mxu0
        %1489 = vdwg.mxu0
        %1490 = vst [vmem:[%s381] sm:$0xff] %v1487
        %s1491 = sand.u32 %s237, 1
        %s1492 = scalar_lea.sflag [#allocation4], %s1491
        %s1493 = sand.u32 %s237, 1
        %s1494 = smul.addr %s1493, 8
        %s1495 = scalar_lea.vmem [#allocation7], %s1494
        // Predicated region
        $region65: #{tpu_custom_call.1} parent=55 // pred_check
          %p1496 = pneg %p247
        $region66: #{tpu_custom_call.1} parent=55 // pred_check_branch
          %1498 = sbr.rel (%p1496) target = $region68
        $region67: #{tpu_custom_call.1} parent=55 // pred_region
          %s1500 = ssub.s32 128, 128
          %1501 = vsyncadd %s1492, %s1500
          %s1502 = smul.addr %s25, 128
          %s1503 = scalar_lea.hbm %s9, %s1502
          %s1505 = sshll.u32 %s1495, 4
          %s1506 = int_to_ptr.vmem [resolvable:$true] %s1505
          %1508 = dma.vmem_to_hbm [thread:$0]  %s1506, 128, %s1503, %s1492
        $region68: #{tpu_custom_call.1} parent=55 // pred_fallthru
          _
      $region56: #{tpu_custom_call.1} parent=5 // pred_fallthru
        _
      %p1509 = scmp.le.s32.totalorder 2, %s20
      // Predicated region
      $region69: #{tpu_custom_call.1} parent=5 // pred_check
        %p1510 = pneg %p1509
      $region70: #{tpu_custom_call.1} parent=5 // pred_check_branch
        %1512 = sbr.rel (%p1510) target = $region72
      $region71: #{tpu_custom_call.1} parent=5 // pred_region
        %s1513 = ssub.s32 %s20, 2
        // Predicated region
        $region73: #{tpu_custom_call.1} parent=71 // pred_check
          %p1514 = pneg %p253
        $region74: #{tpu_custom_call.1} parent=71 // pred_check_branch
          %1516 = sbr.rel (%p1514) target = $region76
        $region75: #{tpu_custom_call.1} parent=71 // pred_region
          %s1517 = sand.u32 %s238, 1
          %s1518 = scalar_lea.sflag [#allocation4], %s1517
          %s1519 = sand.u32 %s238, 1
          %s1520 = smul.addr %s1519, 8
          %s1521 = scalar_lea.vmem [#allocation7], %s1520
          %1522 = dma.done %s1518, 128
        $region76: #{tpu_custom_call.1} parent=71 // pred_fallthru
          _
      $region72: #{tpu_custom_call.1} parent=5 // pred_fallthru
        _
    $region6: #{tpu_custom_call.1} parent=1 // loop_footer
      %s24 = sadd.s32 1, %s20
    $region7: #{tpu_custom_call.1} parent=1 // loop_footer_branch
      %19 = sbr.rel target = $region3
    $region8: #{tpu_custom_call.1} parent=1 // loop_exit
      _
    %1523 = vsyncpa [#allocation3], 1
    %s1524 = scalar_lea.sflag [#allocation3], 1
    %1525 = vsyncpa %s1524, 1
    %1526 = vsyncpa [#allocation6], 1
    %1527 = vsyncpa [#allocation4], 1
    %s1528 = scalar_lea.sflag [#allocation4], 1
    %1529 = vsyncpa %s1528, 1

</llo_original>
